<compile_context>
chip_gen: v7x
topology: tpu7x:2x2x1
jax: 0.10.0
libtpu: 0.0.40
codegen_flags: <defaults>
</compile_context>

<pallas_src>
import functools

import jax
import jax.numpy as jnp
from jax.experimental import pallas as pl
from jax.experimental.pallas import tpu as pltpu

_VMEM = pl.BlockSpec(memory_space=pltpu.MemorySpace.VMEM)
_K23 = 8    # conv_block2/3 kernel size (torch spec)
_PAD2 = 4   # conv_block2 padding (torch spec: Conv1d(32, 64, 8, padding=4))
_PAD3 = 4   # conv_block3 padding (torch spec: Conv1d(64, C_out, 8, padding=4))


def _conv_len(L, K, pad):        # stride-1 Conv1d output length
    return L + 2 * pad - K + 1


def _pool_len(Lc):               # MaxPool1d(kernel_size=2, stride=2, padding=1)
    return Lc // 2 + 1


# ------------------------- in-kernel building blocks -------------------------

def _maxpool_2d(y, Lc):
    """MaxPool1d(kernel=2, stride=2, padding=1) over the row axis of a (Lc, C) value.

    Relies on y >= 0 (post-ReLU), so zero padding never beats a real element.
    One full-width maximum + Lp contiguous row extracts + one concat; all value ops.
    """
    Lp = _pool_len(Lc)
    C = y.shape[1]
    tail = 2 * Lp - Lc - 1                                    # 0 or 1 trailing pad rows
    zrow = jnp.zeros((1, C), y.dtype)
    yp = jnp.concatenate([zrow, y] + [zrow] * tail, axis=0)   # (2*Lp, C)
    m = jnp.maximum(yp[: 2 * Lp - 1, :], yp[1:, :])           # m[j] = max(yp[j], yp[j+1])
    # pooled[i] = m[2*i]  (window i covers original positions {2i-1, 2i})
    return jnp.concatenate([m[2 * i:2 * i + 1, :] for i in range(Lp)], axis=0)  # (Lp, C)


def _pool_pad_im2col(y, Lc, pad, K):
    """Pool a (Lc, C) post-ReLU value, zero-pad, and im2col for the next conv.

    Returns (Lc_next, K*C) f32 with lane order tap-major / channel-minor, matching the
    host-side (K, Cin, Cout) -> (K*Cin, Cout) weight reshape.
    """
    C = y.shape[1]
    Lp = _pool_len(Lc)
    Lc_next = _conv_len(Lp, K, pad)
    p = _maxpool_2d(y, Lc)                                    # (Lp, C) f32
    z = jnp.zeros((pad, C), y.dtype)
    xp = jnp.concatenate([z, p, z], axis=0)                   # (Lp + 2*pad, C); zeros = conv padding
    return jnp.concatenate([xp[k:k + Lc_next, :] for k in range(K)], axis=1)


# ----------------------------- fused kernel ---------------------------------

def _model_kernel(cols1_ref, w1_ref, t1_ref, w2_ref, t2_ref, w3_ref, t3_ref,
                  wl_ref, bl_ref,
                  logits_ref, feat_ref, *, dims):
    B, Lc1, Lc2, Lc3, Lp3 = dims

    def conv(cols_bf16, w_ref, t_ref):
        acc = jnp.dot(cols_bf16, w_ref[...], preferred_element_type=jnp.float32)
        return jnp.maximum(acc + t_ref[...], 0.0)             # BN shift + ReLU in f32

    # ---- block 1: one contraction-(K*Cin) matmul over the host-side im2col slab ----
    y1 = conv(cols1_ref[...], w1_ref, t1_ref)                 # (B*Lc1, 32) f32
    # (nn.Dropout after block 1 is identity in eval mode.)

    # ---- block 2: in-kernel pool + pad + im2col -> ONE contraction-256 matmul ----
    cols2 = jnp.concatenate(
        [_pool_pad_im2col(y1[b * Lc1:(b + 1) * Lc1, :], Lc1, _PAD2, _K23) for b in range(B)],
        axis=0).astype(jnp.bfloat16)                          # (B*Lc2, 8*32), single cast
    y2 = conv(cols2, w2_ref, t2_ref)                          # (B*Lc2, 64) f32

    # ---- block 3: ONE contraction-512 matmul ----
    cols3 = jnp.concatenate(
        [_pool_pad_im2col(y2[b * Lc2:(b + 1) * Lc2, :], Lc2, _PAD3, _K23) for b in range(B)],
        axis=0).astype(jnp.bfloat16)                          # (B*Lc3, 8*64), single cast
    y3 = conv(cols3, w3_ref, t3_ref)                          # (B*Lc3, C3) f32

    # ---- block-3 pool, NCL feature output, fused Linear (ONE contraction-64 matmul) ----
    flat_parts = []
    for b in range(B):
        pb = _maxpool_2d(y3[b * Lc3:(b + 1) * Lc3, :], Lc3)   # (Lp3, C3) f32
        feat_ref[b, :, :] = jnp.transpose(pb, (1, 0))         # NCL (C3, Lp3), f32
        # NLC flatten (l-major, c-minor): lane-concat of the Lp3 pooled rows
        flat_parts.append(jnp.concatenate([pb[l:l + 1, :] for l in range(Lp3)], axis=1))
    flat = jnp.concatenate(flat_parts, axis=0).astype(jnp.bfloat16)   # (B, Lp3*C3)
    logits_ref[...] = (jnp.dot(flat, wl_ref[...], preferred_element_type=jnp.float32)
                       + bl_ref[...])


# ----------------------------- params / model -------------------------------

class Configs:
    input_channels = 4
    kernel_size = 8
    stride = 1
    dropout = 0.35
    final_out_channels = 16
    features_len = 16
    num_classes = 5


def _bn_affine(key, channels, eps=1e-5):
    k1, k2, k3, k4 = jax.random.split(key, 4)
    gamma = 1.0 + 0.1 * jax.random.normal(k1, (channels,), jnp.float32)
    beta = 0.1 * jax.random.normal(k2, (channels,), jnp.float32)
    mean = 0.1 * jax.random.normal(k3, (channels,), jnp.float32)
    var = jax.random.uniform(k4, (channels,), jnp.float32, minval=0.5, maxval=1.5)
    scale = gamma / jnp.sqrt(var + eps)
    shift = beta - mean * scale
    return scale, shift


def init_params(configs, key):
    K = configs.kernel_size
    ks = jax.random.split(key, 8)
    params = {}
    # conv weights stored (K, Cin, Cout) == transpose of torch's (Cout, Cin, K)
    params["w1"] = 0.1 * jax.random.normal(ks[0], (K, configs.input_channels, 32), jnp.float32)
    params["s1"], params["t1"] = _bn_affine(ks[1], 32)
    params["w2"] = 0.1 * jax.random.normal(ks[2], (_K23, 32, 64), jnp.float32)
    params["s2"], params["t2"] = _bn_affine(ks[3], 64)
    params["w3"] = 0.1 * jax.random.normal(ks[4], (_K23, 64, configs.final_out_channels), jnp.float32)
    params["s3"], params["t3"] = _bn_affine(ks[5], configs.final_out_channels)

    L1 = _pool_len(_conv_len(configs.features_len, K, K // 2))
    L2 = _pool_len(_conv_len(L1, _K23, _PAD2))
    L3 = _pool_len(_conv_len(L2, _K23, _PAD3))
    flat_dim = configs.final_out_channels * L3
    # linear weight stored (flat_dim, num_classes); rows in torch's C-major flatten order
    params["wl"] = 0.1 * jax.random.normal(ks[6], (flat_dim, configs.num_classes), jnp.float32)
    params["bl"] = 0.1 * jax.random.normal(ks[7], (configs.num_classes,), jnp.float32)
    return params, L3


def forward(params, configs, x_ncl):
    """x_ncl: (B, input_channels, features_len) — same layout as the PyTorch module."""
    assert configs.stride == 1  # TODO(synk): strided Conv1d (configs.stride != 1) not implemented
    B = x_ncl.shape[0]
    Cin = configs.input_channels
    K1 = configs.kernel_size
    pad1 = K1 // 2
    C3 = configs.final_out_channels
    ncls = configs.num_classes

    Lc1 = _conv_len(configs.features_len, K1, pad1); Lp1 = _pool_len(Lc1)
    Lc2 = _conv_len(Lp1, _K23, _PAD2);               Lp2 = _pool_len(Lc2)
    Lc3 = _conv_len(Lp2, _K23, _PAD3);               Lp3 = _pool_len(Lc3)

    # ---- host-side layout plumbing (tiny; fused / const-folded by XLA) ----
    # Block-1 im2col (Cin=4 is too shallow for the MXU); batch collapsed into MXU rows.
    x_nlc = jnp.transpose(x_ncl, (0, 2, 1)).astype(jnp.float32)           # NCL -> NLC
    xp = jnp.pad(x_nlc, ((0, 0), (pad1, pad1), (0, 0)))
    cols1 = jnp.concatenate([xp[:, k:k + Lc1, :] for k in range(K1)], axis=-1)   # (B, Lc1, K1*Cin)
    cols1 = cols1.reshape(B * Lc1, K1 * Cin).astype(jnp.bfloat16)

    # fold BN scale into the conv weights (exact algebra); bf16 MXU operands
    w1 = (params["w1"] * params["s1"]).reshape(K1 * Cin, 32).astype(jnp.bfloat16)
    w2 = (params["w2"] * params["s2"]).reshape(_K23 * 32, 64).astype(jnp.bfloat16)
    w3 = (params["w3"] * params["s3"]).reshape(_K23 * 64, C3).astype(jnp.bfloat16)
    t1 = params["t1"].reshape(1, 32)
    t2 = params["t2"].reshape(1, 64)
    t3 = params["t3"].reshape(1, C3)
    # linear weight rows are in torch's C-major flatten order (c*Lp3 + l);
    # permute to the kernel's NLC flatten order (l*C3 + c).
    wl = (params["wl"].reshape(C3, Lp3, ncls).transpose(1, 0, 2)
          .reshape(Lp3 * C3, ncls).astype(jnp.bfloat16))
    bl = params["bl"].reshape(1, ncls)

    kernel = functools.partial(_model_kernel, dims=(B, Lc1, Lc2, Lc3, Lp3))
    logits, feat_ncl = pl.pallas_call(
        kernel,
        out_shape=(jax.ShapeDtypeStruct((B, ncls), jnp.float32),
                   jax.ShapeDtypeStruct((B, C3, Lp3), jnp.float32)),
        in_specs=[_VMEM] * 9,
        out_specs=(_VMEM, _VMEM),
    )(cols1, w1, t1, w2, t2, w3, t3, wl, bl)
    return logits, feat_ncl


# ----------------------------- pure-JAX reference ----------------------------

def reference_forward(params, configs, x_ncl):
    """f32 reference with PyTorch semantics (eval mode) for numerical cross-check."""
    x = jnp.transpose(x_ncl, (0, 2, 1)).astype(jnp.float32)      # NLC

    def block(x, w_kio, scale, shift, pad):
        K = w_kio.shape[0]
        B, L, _ = x.shape
        Lc = _conv_len(L, K, pad)
        xp = jnp.pad(x, ((0, 0), (pad, pad), (0, 0)))
        y = sum(jnp.einsum("blc,co->blo", xp[:, k:k + Lc, :], w_kio[k]) for k in range(K))
        y = jnp.maximum(y * scale.reshape(1, 1, -1) + shift.reshape(1, 1, -1), 0.0)
        Lp = _pool_len(Lc)
        ypad = jnp.pad(y, ((0, 0), (1, 2 * Lp - Lc - 1), (0, 0)),
                       constant_values=-jnp.inf)
        return jnp.max(ypad.reshape(B, Lp, 2, -1), axis=2)

    x = block(x, params["w1"], params["s1"], params["t1"], configs.kernel_size // 2)
    x = block(x, params["w2"], params["s2"], params["t2"], _PAD2)
    x = block(x, params["w3"], params["s3"], params["t3"], _PAD3)
    feat_ncl = jnp.transpose(x, (0, 2, 1))
    x_flat = feat_ncl.reshape(feat_ncl.shape[0], -1)             # torch C-major flatten
    logits = x_flat @ params["wl"] + params["bl"]
    return logits, feat_ncl


# ----------------------------- main ------------------------------------------

if __name__ == "__main__":
    cfg = Configs()
    key = jax.random.PRNGKey(0)
    pkey, xkey = jax.random.split(key)
    params, L3 = init_params(cfg, pkey)

    batch = 2
    x_in = jax.random.normal(xkey, (batch, cfg.input_channels, cfg.features_len), jnp.float32)

    fwd = jax.jit(lambda xi: forward(params, cfg, xi))
    logits, feats = fwd(x_in)
    jax.block_until_ready((logits, feats))

    assert logits.shape == (batch, cfg.num_classes)
    assert feats.shape == (batch, cfg.final_out_channels, L3)
    assert bool(jnp.all(jnp.isfinite(logits))) and bool(jnp.all(feats >= 0.0))

    # cross-check against the pure-JAX f32 reference (loose tolerance: bf16 MXU operands)
    ref_logits, ref_feats = reference_forward(params, cfg, x_in)
    assert jnp.allclose(logits, ref_logits, atol=1e-1, rtol=1e-1), \
        float(jnp.max(jnp.abs(logits - ref_logits)))
    assert jnp.allclose(feats, ref_feats, atol=1e-1, rtol=1e-1), \
        float(jnp.max(jnp.abs(feats - ref_feats)))
    print("KERNEL_OK")
</pallas_src>

<mosaic_0001>
module attributes {stable_mosaic.version = 11 : i64} {
  func.func @_model_kernel(%arg0: memref<34x32xbf16, #tpu.memory_space<vmem>>, %arg1: memref<32x32xbf16, #tpu.memory_space<vmem>>, %arg2: memref<1x32xf32, #tpu.memory_space<vmem>>, %arg3: memref<256x64xbf16, #tpu.memory_space<vmem>>, %arg4: memref<1x64xf32, #tpu.memory_space<vmem>>, %arg5: memref<512x16xbf16, #tpu.memory_space<vmem>>, %arg6: memref<1x16xf32, #tpu.memory_space<vmem>>, %arg7: memref<64x5xbf16, #tpu.memory_space<vmem>>, %arg8: memref<1x5xf32, #tpu.memory_space<vmem>>, %arg9: memref<2x5xf32, #tpu.memory_space<vmem>>, %arg10: memref<2x16x4xf32, #tpu.memory_space<vmem>>) attributes {dimension_semantics = [], scalar_prefetch = 0 : i64, scratch_operands = 0 : i64, tpu.core_type = #tpu.core_type<tc>} {
    %c0 = arith.constant 0 : index
    %c0_0 = arith.constant 0 : index
    %0 = vector.load %arg0[%c0, %c0_0] : memref<34x32xbf16, #tpu.memory_space<vmem>>, vector<34x32xbf16>
    %c0_1 = arith.constant 0 : index
    %c0_2 = arith.constant 0 : index
    %1 = vector.load %arg1[%c0_1, %c0_2] : memref<32x32xbf16, #tpu.memory_space<vmem>>, vector<32x32xbf16>
    %cst = arith.constant dense<0.000000e+00> : vector<34x32xf32>
    %2 = tpu.matmul %0, %1, %cst {dimension_numbers = #tpu.dot_dimension_numbers<[1], [0], [0], [1], [0, 0, 1, 1], [], []>} : vector<34x32xbf16>, vector<32x32xbf16>, vector<34x32xf32> -> vector<34x32xf32>
    %c0_3 = arith.constant 0 : index
    %c0_4 = arith.constant 0 : index
    %3 = vector.load %arg2[%c0_3, %c0_4] : memref<1x32xf32, #tpu.memory_space<vmem>>, vector<1x32xf32>
    %4 = vector.broadcast %3 : vector<1x32xf32> to vector<34x32xf32>
    %5 = arith.addf %2, %4 : vector<34x32xf32>
    %cst_5 = arith.constant 0.000000e+00 : f32
    %6 = vector.broadcast %cst_5 : f32 to vector<34x32xf32>
    %7 = arith.maximumf %5, %6 : vector<34x32xf32>
    %8 = vector.extract_strided_slice %7 {offsets = [0, 0], sizes = [17, 32], strides = [1, 1]} : vector<34x32xf32> to vector<17x32xf32>
    %cst_6 = arith.constant 0.000000e+00 : f32
    %9 = vector.broadcast %cst_6 : f32 to vector<1x32xf32>
    %10 = tpu.concatenate %9, %8 in 0 : vector<1x32xf32>, vector<17x32xf32> -> vector<18x32xf32>
    %11 = vector.extract_strided_slice %10 {offsets = [0, 0], sizes = [17, 32], strides = [1, 1]} : vector<18x32xf32> to vector<17x32xf32>
    %12 = vector.extract_strided_slice %10 {offsets = [1, 0], sizes = [17, 32], strides = [1, 1]} : vector<18x32xf32> to vector<17x32xf32>
    %13 = arith.maximumf %11, %12 : vector<17x32xf32>
    %14 = vector.extract_strided_slice %13 {offsets = [0, 0], sizes = [1, 32], strides = [1, 1]} : vector<17x32xf32> to vector<1x32xf32>
    %15 = vector.extract_strided_slice %13 {offsets = [2, 0], sizes = [1, 32], strides = [1, 1]} : vector<17x32xf32> to vector<1x32xf32>
    %16 = vector.extract_strided_slice %13 {offsets = [4, 0], sizes = [1, 32], strides = [1, 1]} : vector<17x32xf32> to vector<1x32xf32>
    %17 = vector.extract_strided_slice %13 {offsets = [6, 0], sizes = [1, 32], strides = [1, 1]} : vector<17x32xf32> to vector<1x32xf32>
    %18 = vector.extract_strided_slice %13 {offsets = [8, 0], sizes = [1, 32], strides = [1, 1]} : vector<17x32xf32> to vector<1x32xf32>
    %19 = vector.extract_strided_slice %13 {offsets = [10, 0], sizes = [1, 32], strides = [1, 1]} : vector<17x32xf32> to vector<1x32xf32>
    %20 = vector.extract_strided_slice %13 {offsets = [12, 0], sizes = [1, 32], strides = [1, 1]} : vector<17x32xf32> to vector<1x32xf32>
    %21 = vector.extract_strided_slice %13 {offsets = [14, 0], sizes = [1, 32], strides = [1, 1]} : vector<17x32xf32> to vector<1x32xf32>
    %22 = vector.extract_strided_slice %13 {offsets = [16, 0], sizes = [1, 32], strides = [1, 1]} : vector<17x32xf32> to vector<1x32xf32>
    %23 = tpu.concatenate %14, %15, %16, %17, %18, %19, %20, %21, %22 in 0 : vector<1x32xf32>, vector<1x32xf32>, vector<1x32xf32>, vector<1x32xf32>, vector<1x32xf32>, vector<1x32xf32>, vector<1x32xf32>, vector<1x32xf32>, vector<1x32xf32> -> vector<9x32xf32>
    %cst_7 = arith.constant 0.000000e+00 : f32
    %24 = vector.broadcast %cst_7 : f32 to vector<4x32xf32>
    %25 = tpu.concatenate %24, %23, %24 in 0 : vector<4x32xf32>, vector<9x32xf32>, vector<4x32xf32> -> vector<17x32xf32>
    %26 = vector.extract_strided_slice %25 {offsets = [0, 0], sizes = [10, 32], strides = [1, 1]} : vector<17x32xf32> to vector<10x32xf32>
    %27 = vector.extract_strided_slice %25 {offsets = [1, 0], sizes = [10, 32], strides = [1, 1]} : vector<17x32xf32> to vector<10x32xf32>
    %28 = vector.extract_strided_slice %25 {offsets = [2, 0], sizes = [10, 32], strides = [1, 1]} : vector<17x32xf32> to vector<10x32xf32>
    %29 = vector.extract_strided_slice %25 {offsets = [3, 0], sizes = [10, 32], strides = [1, 1]} : vector<17x32xf32> to vector<10x32xf32>
    %30 = vector.extract_strided_slice %25 {offsets = [4, 0], sizes = [10, 32], strides = [1, 1]} : vector<17x32xf32> to vector<10x32xf32>
    %31 = vector.extract_strided_slice %25 {offsets = [5, 0], sizes = [10, 32], strides = [1, 1]} : vector<17x32xf32> to vector<10x32xf32>
    %32 = vector.extract_strided_slice %25 {offsets = [6, 0], sizes = [10, 32], strides = [1, 1]} : vector<17x32xf32> to vector<10x32xf32>
    %33 = vector.extract_strided_slice %25 {offsets = [7, 0], sizes = [10, 32], strides = [1, 1]} : vector<17x32xf32> to vector<10x32xf32>
    %34 = tpu.concatenate %26, %27, %28, %29, %30, %31, %32, %33 in 1 : vector<10x32xf32>, vector<10x32xf32>, vector<10x32xf32>, vector<10x32xf32>, vector<10x32xf32>, vector<10x32xf32>, vector<10x32xf32>, vector<10x32xf32> -> vector<10x256xf32>
    %35 = vector.extract_strided_slice %7 {offsets = [17, 0], sizes = [17, 32], strides = [1, 1]} : vector<34x32xf32> to vector<17x32xf32>
    %cst_8 = arith.constant 0.000000e+00 : f32
    %36 = vector.broadcast %cst_8 : f32 to vector<1x32xf32>
    %37 = tpu.concatenate %36, %35 in 0 : vector<1x32xf32>, vector<17x32xf32> -> vector<18x32xf32>
    %38 = vector.extract_strided_slice %37 {offsets = [0, 0], sizes = [17, 32], strides = [1, 1]} : vector<18x32xf32> to vector<17x32xf32>
    %39 = vector.extract_strided_slice %37 {offsets = [1, 0], sizes = [17, 32], strides = [1, 1]} : vector<18x32xf32> to vector<17x32xf32>
    %40 = arith.maximumf %38, %39 : vector<17x32xf32>
    %41 = vector.extract_strided_slice %40 {offsets = [0, 0], sizes = [1, 32], strides = [1, 1]} : vector<17x32xf32> to vector<1x32xf32>
    %42 = vector.extract_strided_slice %40 {offsets = [2, 0], sizes = [1, 32], strides = [1, 1]} : vector<17x32xf32> to vector<1x32xf32>
    %43 = vector.extract_strided_slice %40 {offsets = [4, 0], sizes = [1, 32], strides = [1, 1]} : vector<17x32xf32> to vector<1x32xf32>
    %44 = vector.extract_strided_slice %40 {offsets = [6, 0], sizes = [1, 32], strides = [1, 1]} : vector<17x32xf32> to vector<1x32xf32>
    %45 = vector.extract_strided_slice %40 {offsets = [8, 0], sizes = [1, 32], strides = [1, 1]} : vector<17x32xf32> to vector<1x32xf32>
    %46 = vector.extract_strided_slice %40 {offsets = [10, 0], sizes = [1, 32], strides = [1, 1]} : vector<17x32xf32> to vector<1x32xf32>
    %47 = vector.extract_strided_slice %40 {offsets = [12, 0], sizes = [1, 32], strides = [1, 1]} : vector<17x32xf32> to vector<1x32xf32>
    %48 = vector.extract_strided_slice %40 {offsets = [14, 0], sizes = [1, 32], strides = [1, 1]} : vector<17x32xf32> to vector<1x32xf32>
    %49 = vector.extract_strided_slice %40 {offsets = [16, 0], sizes = [1, 32], strides = [1, 1]} : vector<17x32xf32> to vector<1x32xf32>
    %50 = tpu.concatenate %41, %42, %43, %44, %45, %46, %47, %48, %49 in 0 : vector<1x32xf32>, vector<1x32xf32>, vector<1x32xf32>, vector<1x32xf32>, vector<1x32xf32>, vector<1x32xf32>, vector<1x32xf32>, vector<1x32xf32>, vector<1x32xf32> -> vector<9x32xf32>
    %cst_9 = arith.constant 0.000000e+00 : f32
    %51 = vector.broadcast %cst_9 : f32 to vector<4x32xf32>
    %52 = tpu.concatenate %51, %50, %51 in 0 : vector<4x32xf32>, vector<9x32xf32>, vector<4x32xf32> -> vector<17x32xf32>
    %53 = vector.extract_strided_slice %52 {offsets = [0, 0], sizes = [10, 32], strides = [1, 1]} : vector<17x32xf32> to vector<10x32xf32>
    %54 = vector.extract_strided_slice %52 {offsets = [1, 0], sizes = [10, 32], strides = [1, 1]} : vector<17x32xf32> to vector<10x32xf32>
    %55 = vector.extract_strided_slice %52 {offsets = [2, 0], sizes = [10, 32], strides = [1, 1]} : vector<17x32xf32> to vector<10x32xf32>
    %56 = vector.extract_strided_slice %52 {offsets = [3, 0], sizes = [10, 32], strides = [1, 1]} : vector<17x32xf32> to vector<10x32xf32>
    %57 = vector.extract_strided_slice %52 {offsets = [4, 0], sizes = [10, 32], strides = [1, 1]} : vector<17x32xf32> to vector<10x32xf32>
    %58 = vector.extract_strided_slice %52 {offsets = [5, 0], sizes = [10, 32], strides = [1, 1]} : vector<17x32xf32> to vector<10x32xf32>
    %59 = vector.extract_strided_slice %52 {offsets = [6, 0], sizes = [10, 32], strides = [1, 1]} : vector<17x32xf32> to vector<10x32xf32>
    %60 = vector.extract_strided_slice %52 {offsets = [7, 0], sizes = [10, 32], strides = [1, 1]} : vector<17x32xf32> to vector<10x32xf32>
    %61 = tpu.concatenate %53, %54, %55, %56, %57, %58, %59, %60 in 1 : vector<10x32xf32>, vector<10x32xf32>, vector<10x32xf32>, vector<10x32xf32>, vector<10x32xf32>, vector<10x32xf32>, vector<10x32xf32>, vector<10x32xf32> -> vector<10x256xf32>
    %62 = tpu.concatenate %34, %61 in 0 : vector<10x256xf32>, vector<10x256xf32> -> vector<20x256xf32>
    %63 = arith.truncf %62 : vector<20x256xf32> to vector<20x256xbf16>
    %c0_10 = arith.constant 0 : index
    %c0_11 = arith.constant 0 : index
    %64 = vector.load %arg3[%c0_10, %c0_11] : memref<256x64xbf16, #tpu.memory_space<vmem>>, vector<256x64xbf16>
    %cst_12 = arith.constant dense<0.000000e+00> : vector<20x64xf32>
    %65 = tpu.matmul %63, %64, %cst_12 {dimension_numbers = #tpu.dot_dimension_numbers<[1], [0], [0], [1], [0, 0, 1, 1], [], []>} : vector<20x256xbf16>, vector<256x64xbf16>, vector<20x64xf32> -> vector<20x64xf32>
    %c0_13 = arith.constant 0 : index
    %c0_14 = arith.constant 0 : index
    %66 = vector.load %arg4[%c0_13, %c0_14] : memref<1x64xf32, #tpu.memory_space<vmem>>, vector<1x64xf32>
    %67 = vector.broadcast %66 : vector<1x64xf32> to vector<20x64xf32>
    %68 = arith.addf %65, %67 : vector<20x64xf32>
    %cst_15 = arith.constant 0.000000e+00 : f32
    %69 = vector.broadcast %cst_15 : f32 to vector<20x64xf32>
    %70 = arith.maximumf %68, %69 : vector<20x64xf32>
    %71 = vector.extract_strided_slice %70 {offsets = [0, 0], sizes = [10, 64], strides = [1, 1]} : vector<20x64xf32> to vector<10x64xf32>
    %cst_16 = arith.constant 0.000000e+00 : f32
    %72 = vector.broadcast %cst_16 : f32 to vector<1x64xf32>
    %73 = tpu.concatenate %72, %71, %72 in 0 : vector<1x64xf32>, vector<10x64xf32>, vector<1x64xf32> -> vector<12x64xf32>
    %74 = vector.extract_strided_slice %73 {offsets = [0, 0], sizes = [11, 64], strides = [1, 1]} : vector<12x64xf32> to vector<11x64xf32>
    %75 = vector.extract_strided_slice %73 {offsets = [1, 0], sizes = [11, 64], strides = [1, 1]} : vector<12x64xf32> to vector<11x64xf32>
    %76 = arith.maximumf %74, %75 : vector<11x64xf32>
    %77 = vector.extract_strided_slice %76 {offsets = [0, 0], sizes = [1, 64], strides = [1, 1]} : vector<11x64xf32> to vector<1x64xf32>
    %78 = vector.extract_strided_slice %76 {offsets = [2, 0], sizes = [1, 64], strides = [1, 1]} : vector<11x64xf32> to vector<1x64xf32>
    %79 = vector.extract_strided_slice %76 {offsets = [4, 0], sizes = [1, 64], strides = [1, 1]} : vector<11x64xf32> to vector<1x64xf32>
    %80 = vector.extract_strided_slice %76 {offsets = [6, 0], sizes = [1, 64], strides = [1, 1]} : vector<11x64xf32> to vector<1x64xf32>
    %81 = vector.extract_strided_slice %76 {offsets = [8, 0], sizes = [1, 64], strides = [1, 1]} : vector<11x64xf32> to vector<1x64xf32>
    %82 = vector.extract_strided_slice %76 {offsets = [10, 0], sizes = [1, 64], strides = [1, 1]} : vector<11x64xf32> to vector<1x64xf32>
    %83 = tpu.concatenate %77, %78, %79, %80, %81, %82 in 0 : vector<1x64xf32>, vector<1x64xf32>, vector<1x64xf32>, vector<1x64xf32>, vector<1x64xf32>, vector<1x64xf32> -> vector<6x64xf32>
    %cst_17 = arith.constant 0.000000e+00 : f32
    %84 = vector.broadcast %cst_17 : f32 to vector<4x64xf32>
    %85 = tpu.concatenate %84, %83, %84 in 0 : vector<4x64xf32>, vector<6x64xf32>, vector<4x64xf32> -> vector<14x64xf32>
    %86 = vector.extract_strided_slice %85 {offsets = [0, 0], sizes = [7, 64], strides = [1, 1]} : vector<14x64xf32> to vector<7x64xf32>
    %87 = vector.extract_strided_slice %85 {offsets = [1, 0], sizes = [7, 64], strides = [1, 1]} : vector<14x64xf32> to vector<7x64xf32>
    %88 = vector.extract_strided_slice %85 {offsets = [2, 0], sizes = [7, 64], strides = [1, 1]} : vector<14x64xf32> to vector<7x64xf32>
    %89 = vector.extract_strided_slice %85 {offsets = [3, 0], sizes = [7, 64], strides = [1, 1]} : vector<14x64xf32> to vector<7x64xf32>
    %90 = vector.extract_strided_slice %85 {offsets = [4, 0], sizes = [7, 64], strides = [1, 1]} : vector<14x64xf32> to vector<7x64xf32>
    %91 = vector.extract_strided_slice %85 {offsets = [5, 0], sizes = [7, 64], strides = [1, 1]} : vector<14x64xf32> to vector<7x64xf32>
    %92 = vector.extract_strided_slice %85 {offsets = [6, 0], sizes = [7, 64], strides = [1, 1]} : vector<14x64xf32> to vector<7x64xf32>
    %93 = vector.extract_strided_slice %85 {offsets = [7, 0], sizes = [7, 64], strides = [1, 1]} : vector<14x64xf32> to vector<7x64xf32>
    %94 = tpu.concatenate %86, %87, %88, %89, %90, %91, %92, %93 in 1 : vector<7x64xf32>, vector<7x64xf32>, vector<7x64xf32>, vector<7x64xf32>, vector<7x64xf32>, vector<7x64xf32>, vector<7x64xf32>, vector<7x64xf32> -> vector<7x512xf32>
    %95 = vector.extract_strided_slice %70 {offsets = [10, 0], sizes = [10, 64], strides = [1, 1]} : vector<20x64xf32> to vector<10x64xf32>
    %cst_18 = arith.constant 0.000000e+00 : f32
    %96 = vector.broadcast %cst_18 : f32 to vector<1x64xf32>
    %97 = tpu.concatenate %96, %95, %96 in 0 : vector<1x64xf32>, vector<10x64xf32>, vector<1x64xf32> -> vector<12x64xf32>
    %98 = vector.extract_strided_slice %97 {offsets = [0, 0], sizes = [11, 64], strides = [1, 1]} : vector<12x64xf32> to vector<11x64xf32>
    %99 = vector.extract_strided_slice %97 {offsets = [1, 0], sizes = [11, 64], strides = [1, 1]} : vector<12x64xf32> to vector<11x64xf32>
    %100 = arith.maximumf %98, %99 : vector<11x64xf32>
    %101 = vector.extract_strided_slice %100 {offsets = [0, 0], sizes = [1, 64], strides = [1, 1]} : vector<11x64xf32> to vector<1x64xf32>
    %102 = vector.extract_strided_slice %100 {offsets = [2, 0], sizes = [1, 64], strides = [1, 1]} : vector<11x64xf32> to vector<1x64xf32>
    %103 = vector.extract_strided_slice %100 {offsets = [4, 0], sizes = [1, 64], strides = [1, 1]} : vector<11x64xf32> to vector<1x64xf32>
    %104 = vector.extract_strided_slice %100 {offsets = [6, 0], sizes = [1, 64], strides = [1, 1]} : vector<11x64xf32> to vector<1x64xf32>
    %105 = vector.extract_strided_slice %100 {offsets = [8, 0], sizes = [1, 64], strides = [1, 1]} : vector<11x64xf32> to vector<1x64xf32>
    %106 = vector.extract_strided_slice %100 {offsets = [10, 0], sizes = [1, 64], strides = [1, 1]} : vector<11x64xf32> to vector<1x64xf32>
    %107 = tpu.concatenate %101, %102, %103, %104, %105, %106 in 0 : vector<1x64xf32>, vector<1x64xf32>, vector<1x64xf32>, vector<1x64xf32>, vector<1x64xf32>, vector<1x64xf32> -> vector<6x64xf32>
    %cst_19 = arith.constant 0.000000e+00 : f32
    %108 = vector.broadcast %cst_19 : f32 to vector<4x64xf32>
    %109 = tpu.concatenate %108, %107, %108 in 0 : vector<4x64xf32>, vector<6x64xf32>, vector<4x64xf32> -> vector<14x64xf32>
    %110 = vector.extract_strided_slice %109 {offsets = [0, 0], sizes = [7, 64], strides = [1, 1]} : vector<14x64xf32> to vector<7x64xf32>
    %111 = vector.extract_strided_slice %109 {offsets = [1, 0], sizes = [7, 64], strides = [1, 1]} : vector<14x64xf32> to vector<7x64xf32>
    %112 = vector.extract_strided_slice %109 {offsets = [2, 0], sizes = [7, 64], strides = [1, 1]} : vector<14x64xf32> to vector<7x64xf32>
    %113 = vector.extract_strided_slice %109 {offsets = [3, 0], sizes = [7, 64], strides = [1, 1]} : vector<14x64xf32> to vector<7x64xf32>
    %114 = vector.extract_strided_slice %109 {offsets = [4, 0], sizes = [7, 64], strides = [1, 1]} : vector<14x64xf32> to vector<7x64xf32>
    %115 = vector.extract_strided_slice %109 {offsets = [5, 0], sizes = [7, 64], strides = [1, 1]} : vector<14x64xf32> to vector<7x64xf32>
    %116 = vector.extract_strided_slice %109 {offsets = [6, 0], sizes = [7, 64], strides = [1, 1]} : vector<14x64xf32> to vector<7x64xf32>
    %117 = vector.extract_strided_slice %109 {offsets = [7, 0], sizes = [7, 64], strides = [1, 1]} : vector<14x64xf32> to vector<7x64xf32>
    %118 = tpu.concatenate %110, %111, %112, %113, %114, %115, %116, %117 in 1 : vector<7x64xf32>, vector<7x64xf32>, vector<7x64xf32>, vector<7x64xf32>, vector<7x64xf32>, vector<7x64xf32>, vector<7x64xf32>, vector<7x64xf32> -> vector<7x512xf32>
    %119 = tpu.concatenate %94, %118 in 0 : vector<7x512xf32>, vector<7x512xf32> -> vector<14x512xf32>
    %120 = arith.truncf %119 : vector<14x512xf32> to vector<14x512xbf16>
    %c0_20 = arith.constant 0 : index
    %c0_21 = arith.constant 0 : index
    %121 = vector.load %arg5[%c0_20, %c0_21] : memref<512x16xbf16, #tpu.memory_space<vmem>>, vector<512x16xbf16>
    %cst_22 = arith.constant dense<0.000000e+00> : vector<14x16xf32>
    %122 = tpu.matmul %120, %121, %cst_22 {dimension_numbers = #tpu.dot_dimension_numbers<[1], [0], [0], [1], [0, 0, 1, 1], [], []>} : vector<14x512xbf16>, vector<512x16xbf16>, vector<14x16xf32> -> vector<14x16xf32>
    %c0_23 = arith.constant 0 : index
    %c0_24 = arith.constant 0 : index
    %123 = vector.load %arg6[%c0_23, %c0_24] : memref<1x16xf32, #tpu.memory_space<vmem>>, vector<1x16xf32>
    %124 = vector.broadcast %123 : vector<1x16xf32> to vector<14x16xf32>
    %125 = arith.addf %122, %124 : vector<14x16xf32>
    %cst_25 = arith.constant 0.000000e+00 : f32
    %126 = vector.broadcast %cst_25 : f32 to vector<14x16xf32>
    %127 = arith.maximumf %125, %126 : vector<14x16xf32>
    %128 = vector.extract_strided_slice %127 {offsets = [0, 0], sizes = [7, 16], strides = [1, 1]} : vector<14x16xf32> to vector<7x16xf32>
    %cst_26 = arith.constant 0.000000e+00 : f32
    %129 = vector.broadcast %cst_26 : f32 to vector<1x16xf32>
    %130 = tpu.concatenate %129, %128 in 0 : vector<1x16xf32>, vector<7x16xf32> -> vector<8x16xf32>
    %131 = vector.extract_strided_slice %130 {offsets = [0, 0], sizes = [7, 16], strides = [1, 1]} : vector<8x16xf32> to vector<7x16xf32>
    %132 = vector.extract_strided_slice %130 {offsets = [1, 0], sizes = [7, 16], strides = [1, 1]} : vector<8x16xf32> to vector<7x16xf32>
    %133 = arith.maximumf %131, %132 : vector<7x16xf32>
    %134 = vector.extract_strided_slice %133 {offsets = [0, 0], sizes = [1, 16], strides = [1, 1]} : vector<7x16xf32> to vector<1x16xf32>
    %135 = vector.extract_strided_slice %133 {offsets = [2, 0], sizes = [1, 16], strides = [1, 1]} : vector<7x16xf32> to vector<1x16xf32>
    %136 = vector.extract_strided_slice %133 {offsets = [4, 0], sizes = [1, 16], strides = [1, 1]} : vector<7x16xf32> to vector<1x16xf32>
    %137 = vector.extract_strided_slice %133 {offsets = [6, 0], sizes = [1, 16], strides = [1, 1]} : vector<7x16xf32> to vector<1x16xf32>
    %138 = tpu.concatenate %134, %135, %136, %137 in 0 : vector<1x16xf32>, vector<1x16xf32>, vector<1x16xf32>, vector<1x16xf32> -> vector<4x16xf32>
    %139 = tpu.transpose %138, [1, 0] : vector<4x16xf32> -> vector<16x4xf32>
    %c0_27 = arith.constant 0 : index
    %c0_28 = arith.constant 0 : index
    %c0_29 = arith.constant 0 : index
    %140 = vector.load %arg10[%c0_27, %c0_28, %c0_29] : memref<2x16x4xf32, #tpu.memory_space<vmem>>, vector<1x16x4xf32>
    %141 = vector.shape_cast %140 : vector<1x16x4xf32> to vector<16x4xf32>
    %142 = vector.shape_cast %139 : vector<16x4xf32> to vector<1x16x4xf32>
    tpu.vector_store %arg10[%c0_27, %c0_28, %c0_29], %142 {strides = array<i32>} : memref<2x16x4xf32, #tpu.memory_space<vmem>>, vector<1x16x4xf32>,
    %143 = vector.extract_strided_slice %138 {offsets = [0, 0], sizes = [1, 16], strides = [1, 1]} : vector<4x16xf32> to vector<1x16xf32>
    %144 = vector.extract_strided_slice %138 {offsets = [1, 0], sizes = [1, 16], strides = [1, 1]} : vector<4x16xf32> to vector<1x16xf32>
    %145 = vector.extract_strided_slice %138 {offsets = [2, 0], sizes = [1, 16], strides = [1, 1]} : vector<4x16xf32> to vector<1x16xf32>
    %146 = vector.extract_strided_slice %138 {offsets = [3, 0], sizes = [1, 16], strides = [1, 1]} : vector<4x16xf32> to vector<1x16xf32>
    %147 = tpu.concatenate %143, %144, %145, %146 in 1 : vector<1x16xf32>, vector<1x16xf32>, vector<1x16xf32>, vector<1x16xf32> -> vector<1x64xf32>
    %148 = vector.extract_strided_slice %127 {offsets = [7, 0], sizes = [7, 16], strides = [1, 1]} : vector<14x16xf32> to vector<7x16xf32>
    %cst_30 = arith.constant 0.000000e+00 : f32
    %149 = vector.broadcast %cst_30 : f32 to vector<1x16xf32>
    %150 = tpu.concatenate %149, %148 in 0 : vector<1x16xf32>, vector<7x16xf32> -> vector<8x16xf32>
    %151 = vector.extract_strided_slice %150 {offsets = [0, 0], sizes = [7, 16], strides = [1, 1]} : vector<8x16xf32> to vector<7x16xf32>
    %152 = vector.extract_strided_slice %150 {offsets = [1, 0], sizes = [7, 16], strides = [1, 1]} : vector<8x16xf32> to vector<7x16xf32>
    %153 = arith.maximumf %151, %152 : vector<7x16xf32>
    %154 = vector.extract_strided_slice %153 {offsets = [0, 0], sizes = [1, 16], strides = [1, 1]} : vector<7x16xf32> to vector<1x16xf32>
    %155 = vector.extract_strided_slice %153 {offsets = [2, 0], sizes = [1, 16], strides = [1, 1]} : vector<7x16xf32> to vector<1x16xf32>
    %156 = vector.extract_strided_slice %153 {offsets = [4, 0], sizes = [1, 16], strides = [1, 1]} : vector<7x16xf32> to vector<1x16xf32>
    %157 = vector.extract_strided_slice %153 {offsets = [6, 0], sizes = [1, 16], strides = [1, 1]} : vector<7x16xf32> to vector<1x16xf32>
    %158 = tpu.concatenate %154, %155, %156, %157 in 0 : vector<1x16xf32>, vector<1x16xf32>, vector<1x16xf32>, vector<1x16xf32> -> vector<4x16xf32>
    %159 = tpu.transpose %158, [1, 0] : vector<4x16xf32> -> vector<16x4xf32>
    %c1 = arith.constant 1 : index
    %c0_31 = arith.constant 0 : index
    %c0_32 = arith.constant 0 : index
    %160 = vector.load %arg10[%c1, %c0_31, %c0_32] : memref<2x16x4xf32, #tpu.memory_space<vmem>>, vector<1x16x4xf32>
    %161 = vector.shape_cast %160 : vector<1x16x4xf32> to vector<16x4xf32>
    %162 = vector.shape_cast %159 : vector<16x4xf32> to vector<1x16x4xf32>
    tpu.vector_store %arg10[%c1, %c0_31, %c0_32], %162 {strides = array<i32>} : memref<2x16x4xf32, #tpu.memory_space<vmem>>, vector<1x16x4xf32>,
    %163 = vector.extract_strided_slice %158 {offsets = [0, 0], sizes = [1, 16], strides = [1, 1]} : vector<4x16xf32> to vector<1x16xf32>
    %164 = vector.extract_strided_slice %158 {offsets = [1, 0], sizes = [1, 16], strides = [1, 1]} : vector<4x16xf32> to vector<1x16xf32>
    %165 = vector.extract_strided_slice %158 {offsets = [2, 0], sizes = [1, 16], strides = [1, 1]} : vector<4x16xf32> to vector<1x16xf32>
    %166 = vector.extract_strided_slice %158 {offsets = [3, 0], sizes = [1, 16], strides = [1, 1]} : vector<4x16xf32> to vector<1x16xf32>
    %167 = tpu.concatenate %163, %164, %165, %166 in 1 : vector<1x16xf32>, vector<1x16xf32>, vector<1x16xf32>, vector<1x16xf32> -> vector<1x64xf32>
    %168 = tpu.concatenate %147, %167 in 0 : vector<1x64xf32>, vector<1x64xf32> -> vector<2x64xf32>
    %169 = arith.truncf %168 : vector<2x64xf32> to vector<2x64xbf16>
    %c0_33 = arith.constant 0 : index
    %c0_34 = arith.constant 0 : index
    %170 = vector.load %arg7[%c0_33, %c0_34] : memref<64x5xbf16, #tpu.memory_space<vmem>>, vector<64x5xbf16>
    %cst_35 = arith.constant dense<0.000000e+00> : vector<2x5xf32>
    %171 = tpu.matmul %169, %170, %cst_35 {dimension_numbers = #tpu.dot_dimension_numbers<[1], [0], [0], [1], [0, 0, 1, 1], [], []>} : vector<2x64xbf16>, vector<64x5xbf16>, vector<2x5xf32> -> vector<2x5xf32>
    %c0_36 = arith.constant 0 : index
    %c0_37 = arith.constant 0 : index
    %172 = vector.load %arg8[%c0_36, %c0_37] : memref<1x5xf32, #tpu.memory_space<vmem>>, vector<1x5xf32>
    %173 = vector.broadcast %172 : vector<1x5xf32> to vector<2x5xf32>
    %174 = arith.addf %171, %173 : vector<2x5xf32>
    %c0_38 = arith.constant 0 : index
    %c0_39 = arith.constant 0 : index
    %175 = vector.load %arg9[%c0_38, %c0_39] : memref<2x5xf32, #tpu.memory_space<vmem>>, vector<2x5xf32>
    tpu.vector_store %arg9[%c0_38, %c0_39], %174 {strides = array<i32>} : memref<2x5xf32, #tpu.memory_space<vmem>>, vector<2x5xf32>,
    return
  }
}

</mosaic_0001>

<llo_original>
// kernel: _lambda_.1
$region0: #{_lambda_.1}
  #allocation0 [shape = 'u32[]', space=smem, size = 0x4, offset = 0x4, fixed_abs, tag = 'smem constant byte address 0x4 - core index']
  #allocation1 [shape = 'u32[144,128]{1,0:T(1,128)}', space=vmem, size = 0x12000, scoped, tag = 'internal scratch']
  %s0 = inlined_call_operand.vmem [shape: bf16[34,32], index: 0, kind: input, shape index: {}]
  %s1 = inlined_call_operand.vmem [shape: bf16[32,32], index: 1, kind: input, shape index: {}]
  %s2 = inlined_call_operand.vmem [shape: f32[1,32], index: 2, kind: input, shape index: {}]
  %s3 = inlined_call_operand.hbm [shape: bf16[256,64], index: 3, kind: input, shape index: {}]
  %s4 = inlined_call_operand.vmem [shape: f32[1,64], index: 4, kind: input, shape index: {}]
  %s5 = inlined_call_operand.vmem [shape: bf16[512,16], index: 5, kind: input, shape index: {}]
  %s6 = inlined_call_operand.vmem [shape: f32[1,16], index: 6, kind: input, shape index: {}]
  %s7 = inlined_call_operand.vmem [shape: bf16[64,5], index: 7, kind: input, shape index: {}]
  %s8 = inlined_call_operand.vmem [shape: f32[1,5], index: 8, kind: input, shape index: {}]
  %s9 = inlined_call_operand.hbm [shape: f32[2,5], index: 9, kind: output, shape index: {0}]
  %s10 = inlined_call_operand.vmem [shape: f32[2,16,4], index: 10, kind: output, shape index: {1}]
  %11 = xla_tuple %s9, %s10
  %s12 = sld [smem:[#allocation0]]
  $region58: #{_lambda_.1} parent=0
    _
  %s14 = ssub.s32 1, %s12
  %s15 = scalar_select 0, %s14, %s12
  $region1: #{_lambda_.1} parent=0
    #allocation2 [shape = 'u8[65536]{0}', space=vmem, size = 0x10000, scoped, tag = 'input window, operand 3, single buffered']
    #allocation3 [shape = 's32[1]{0}', space=sflag, size = 0x4, scoped, tag = 'scoped memory for _lambda_.1']
    #allocation4 [shape = 's32[1]{0}', space=sflag, size = 0x4, scoped, tag = 'scoped memory for _lambda_.1']
    #allocation5 [shape = 'u8[1024]{0}', space=vmem, size = 0x400, scoped, tag = 'output window, operand 0, single buffered']
    %16 = vsyncpa [#allocation3], 0
    %17 = vsyncpa [#allocation4], 0
    // Predicated region
    $region2: #{_lambda_.1} parent=1 // pred_check
      _
    $region3: #{_lambda_.1} parent=1 // pred_check_branch
      %19 = sbr.rel (0) target = $region5
    $region4: #{_lambda_.1} parent=1 // pred_region
      _
    $region5: #{_lambda_.1} parent=1 // pred_fallthru
      _
    // Predicated region
    $region6: #{_lambda_.1} parent=1 // pred_check
      _
    $region7: #{_lambda_.1} parent=1 // pred_check_branch
      %21 = sbr.rel (0) target = $region9
    $region8: #{_lambda_.1} parent=1 // pred_region
      _
    $region9: #{_lambda_.1} parent=1 // pred_fallthru
      _
    // Predicated region
    $region10: #{_lambda_.1} parent=1 // pred_check
      _
    $region11: #{_lambda_.1} parent=1 // pred_check_branch
      %23 = sbr.rel (0) target = $region13
    $region12: #{_lambda_.1} parent=1 // pred_region
      _
    $region13: #{_lambda_.1} parent=1 // pred_fallthru
      _
    // Predicated region
    $region14: #{_lambda_.1} parent=1 // pred_check
      _
    $region15: #{_lambda_.1} parent=1 // pred_check_branch
      %25 = sbr.rel (0) target = $region17
    $region16: #{_lambda_.1} parent=1 // pred_region
      %s27 = ssub.s32 2048, 2048
      %28 = vsyncadd [#allocation3], %s27
      %s29 = sshll.u32 [#allocation2], 4
      %s30 = int_to_ptr.vmem [resolvable:$true] %s29
      %35 = dma.hbm_to_vmem [thread:$0]  %s3, 2048, %s30, [#allocation3], 64, 64, 4
    $region17: #{_lambda_.1} parent=1 // pred_fallthru
      _
    // Predicated region
    $region18: #{_lambda_.1} parent=1 // pred_check
      _
    $region19: #{_lambda_.1} parent=1 // pred_check_branch
      %37 = sbr.rel (0) target = $region21
    $region20: #{_lambda_.1} parent=1 // pred_region
      _
    $region21: #{_lambda_.1} parent=1 // pred_fallthru
      _
    // Predicated region
    $region22: #{_lambda_.1} parent=1 // pred_check
      _
    $region23: #{_lambda_.1} parent=1 // pred_check_branch
      %39 = sbr.rel (0) target = $region25
    $region24: #{_lambda_.1} parent=1 // pred_region
      _
    $region25: #{_lambda_.1} parent=1 // pred_fallthru
      _
    // Predicated region
    $region26: #{_lambda_.1} parent=1 // pred_check
      _
    $region27: #{_lambda_.1} parent=1 // pred_check_branch
      %41 = sbr.rel (0) target = $region29
    $region28: #{_lambda_.1} parent=1 // pred_region
      _
    $region29: #{_lambda_.1} parent=1 // pred_fallthru
      _
    // Predicated region
    $region30: #{_lambda_.1} parent=1 // pred_check
      _
    $region31: #{_lambda_.1} parent=1 // pred_check_branch
      %43 = sbr.rel (0) target = $region33
    $region32: #{_lambda_.1} parent=1 // pred_region
      _
    $region33: #{_lambda_.1} parent=1 // pred_fallthru
      _
    // Predicated region
    $region34: #{_lambda_.1} parent=1 // pred_check
      _
    $region35: #{_lambda_.1} parent=1 // pred_check_branch
      %45 = sbr.rel (0) target = $region37
    $region36: #{_lambda_.1} parent=1 // pred_region
      _
    $region37: #{_lambda_.1} parent=1 // pred_fallthru
      _
    // Predicated region
    $region38: #{_lambda_.1} parent=1 // pred_check
      _
    $region39: #{_lambda_.1} parent=1 // pred_check_branch
      %47 = sbr.rel (0) target = $region41
    $region40: #{_lambda_.1} parent=1 // pred_region
      %48 = dma.done [#allocation3], 2048
    $region41: #{_lambda_.1} parent=1 // pred_fallthru
      _
    %v50 = vld [vmem:[%s0] sm:$0xf]
    %v51 = vld [vmem:[%s0 + $0x4] sm:$0xf]
    %v52 = vld [vmem:[%s0 + $0x8] sm:$0xf]
    %v53 = vld [vmem:[%s0 + $0xc] sm:$0xf]
    %v54 = vld [vmem:[%s0 + $0x10] sm:$0x1]
    %v55 = vld [vmem:[%s1] sm:$0xf]
    %v56 = vld [vmem:[%s1 + $0x4] sm:$0xf]
    %v57 = vld [vmem:[%s1 + $0x8] sm:$0xf]
    %v58 = vld [vmem:[%s1 + $0xc] sm:$0xf]
    %v59 = vld [vmem:[%s2] sm:$0x1]
    %v61 = vlaneseq
    %v62 = vshrl.u32 %v61, 7
    %v63 = vsub.s32 0, %v62
    %v64 = vrot.slane %v59, %v63
    %v71 = vunpack.c.l.b16 %v50
    %v72 = vunpack.c.l.b16 %v51
    %v73 = vunpack.c.l.b16 %v52
    %v74 = vunpack.c.l.b16 %v53
    %v75 = vunpack.c.l.b16 %v54
    %v76 = vpack.c.b16 %v72, %v71
    %v77 = vpack.c.b16 %v74, %v73
    %v78 = vpack.c.b16 %v75, %v75
    %v83 = vunpack.c.l.b16 %v55
    %v84 = vunpack.c.l.b16 %v56
    %v85 = vunpack.c.l.b16 %v57
    %v86 = vunpack.c.l.b16 %v58
    %v87 = vpack.c.b16 %v84, %v83
    %v88 = vpack.c.b16 %v86, %v85
    %vm91 = vcmask 261120
    %v93 = vsel %vm91, %v76, 0
    %v96 = vsel %vm91, %v77, 0
    %v99 = vsel %vm91, %v78, 0
    %101 = vmatprep.subr.bf16.mxu0 0
    %102 = vmatpush1.bf16.msra.mxu0 %v87
    %103 = vmatprep.subr.bf16.mxu0 0
    %104 = vmatpush1.bf16.msra.mxu0 %v88
    %105 = vmatprep.subr.bf16.mxu0 0
    %106 = vmatpush1.bf16.msra.mxu0 0
    %107 = vmatprep.subr.bf16.mxu0 0
    %108 = vmatpush1.bf16.msra.mxu0 0
    %109 = vmatprep.subr.bf16.mxu0 0
    %110 = vmatpush1.bf16.msra.mxu0 0
    %111 = vmatprep.subr.bf16.mxu0 0
    %112 = vmatpush1.bf16.msra.mxu0 0
    %113 = vmatprep.subr.bf16.mxu0 0
    %114 = vmatpush1.bf16.msra.mxu0 0
    %115 = vmatprep.subr.bf16.mxu0 0
    %116 = vmatpush1.bf16.msra.mxu0 0
    %117 = vmatprep.subr.bf16.mxu0 0
    %118 = vmatpush1.bf16.msra.mxu0 0
    %119 = vmatprep.subr.bf16.mxu0 0
    %120 = vmatpush1.bf16.msra.mxu0 0
    %121 = vmatprep.subr.bf16.mxu0 0
    %122 = vmatpush1.bf16.msra.mxu0 0
    %123 = vmatprep.subr.bf16.mxu0 0
    %124 = vmatpush1.bf16.msra.mxu0 0
    %125 = vmatprep.subr.bf16.mxu0 0
    %126 = vmatpush1.bf16.msra.mxu0 0
    %127 = vmatprep.subr.bf16.mxu0 0
    %128 = vmatpush1.bf16.msra.mxu0 0
    %129 = vmatprep.subr.bf16.mxu0 0
    %130 = vmatpush1.bf16.msra.mxu0 0
    %131 = vmatprep.subr.bf16.mxu0 0
    %132 = vmatpush1.bf16.msra.mxu0 0
    %133 = vmatprep.mubr.bf16.mxu0 0
    %134 = vmatmul.mubr.bf16.gmra.mrb[0].mxu0 %v93
    %v135 = vpop.f32.mrb[0].mxu0
    %v136 = vadd.f32 %v64, %v135
    %v137 = vpop.f32.mrb[0].mxu0
    %v138 = vpop.f32.mrb[0].mxu0
    %v139 = vadd.f32 %v64, %v138
    %v140 = vpop.f32.mrb[0].mxu0
    %141 = vmatprep.mubr.bf16.mxu0 0
    %142 = vmatmul.mubr.bf16.gmra.mrb[0].mxu0 %v96
    %v143 = vpop.f32.mrb[0].mxu0
    %v144 = vadd.f32 %v64, %v143
    %v145 = vpop.f32.mrb[0].mxu0
    %v146 = vpop.f32.mrb[0].mxu0
    %v147 = vadd.f32 %v64, %v146
    %v148 = vpop.f32.mrb[0].mxu0
    %149 = vmatprep.mubr.bf16.mxu0 0
    %150 = vmatmul.mubr.bf16.gmra.mrb[0].mxu0 %v99
    %v151 = vpop.f32.mrb[0].mxu0
    %v152 = vadd.f32 %v64, %v151
    %v153 = vpop.f32.mrb[0].mxu0
    %v154 = vpop.f32.mrb[0].mxu0
    %v155 = vpop.f32.mrb[0].mxu0
    %156 = vdwg.mxu0
    %v157 = vmax.f32 %v136, 0.0
    %v158 = vmax.f32 %v139, 0.0
    %v159 = vmax.f32 %v144, 0.0
    %v160 = vmax.f32 %v147, 0.0
    %v161 = vmax.f32 %v152, 0.0
    %vm165 = vcmask 1040384
    %v166 = vrot.slane %v157, 7
    %v167 = vrot.slane %v158, 7
    %v168 = vsel %vm165, %v166, %v167
    %v169 = vrot.slane %v159, 7
    %v170 = vsel %vm165, %v167, %v169
    %v174 = vsel %vm165, 0.0, %v166
    %vm176 = vcmask 1046528
    %v177 = vrot.slane %v174, 1
    %v178 = vrot.slane %v168, 1
    %v179 = vsel %vm176, %v177, %v178
    %v180 = vrot.slane %v170, 1
    %v181 = vsel %vm176, %v178, %v180
    %v185 = vmax.f32 %v174, %v179
    %v186 = vmax.f32 %v168, %v181
    %v187 = vmax.f32 %v170, %v180
    %v189 = vrot.slane %v185, 1
    %v191 = vrot.slane %v185, 2
    %v193 = vrot.slane %v185, 3
    %v196 = vrot.slane %v186, 4
    %v198 = vrot.slane %v186, 5
    %v200 = vrot.slane %v186, 6
    %v202 = vrot.slane %v186, 7
    %v204 = vsel %vm165, %v185, %v189
    %vm205 = vcmask 1041408
    %v206 = vsel %vm205, %v204, %v191
    %vm207 = vcmask 1042432
    %v208 = vsel %vm207, %v206, %v193
    %vm209 = vcmask 1043456
    %v210 = vsel %vm209, %v208, %v196
    %vm211 = vcmask 1044480
    %v212 = vsel %vm211, %v210, %v198
    %vm213 = vcmask 1045504
    %v214 = vsel %vm213, %v212, %v200
    %v215 = vsel %vm176, %v214, %v202
    %v218 = vrot.slane %v215, 4
    %v219 = vrot.slane %v187, 4
    %v220 = vsel %vm209, %v218, %v219
    %v223 = vsel %vm209, 0.0, %v218
    %v224 = vsel %vm211, %v220, 0.0
    %v227 = vrot.slane %v223, 1
    %v228 = vrot.slane %v224, 1
    %v229 = vsel %vm176, %v227, %v228
    %230 = vrot.lane.b32.xlu0 %v229, 32
    %v231 = vpop.permute.xlu0 %230
    %232 = vrot.lane.b32.xlu0 %v228, 32
    %v233 = vpop.permute.xlu0 %232
    %v236 = vrot.slane %v223, 2
    %v237 = vrot.slane %v224, 2
    %v238 = vsel %vm213, %v236, %v237
    %239 = vrot.lane.b32.xlu0 %v238, 64
    %v240 = vpop.permute.xlu0 %239
    %241 = vrot.lane.b32.xlu0 %v237, 64
    %v242 = vpop.permute.xlu0 %241
    %v245 = vrot.slane %v223, 3
    %v246 = vrot.slane %v224, 3
    %v247 = vsel %vm211, %v245, %v246
    %248 = vrot.lane.b32.xlu0 %v247, 96
    %v249 = vpop.permute.xlu0 %248
    %250 = vrot.lane.b32.xlu0 %v246, 96
    %v251 = vpop.permute.xlu0 %250
    %v254 = vrot.slane %v223, 4
    %v255 = vrot.slane %v224, 4
    %v256 = vsel %vm209, %v254, %v255
    %v259 = vrot.slane %v223, 5
    %v260 = vrot.slane %v224, 5
    %v261 = vsel %vm207, %v259, %v260
    %262 = vrot.lane.b32.xlu0 %v261, 32
    %v263 = vpop.permute.xlu0 %262
    %264 = vrot.lane.b32.xlu0 %v260, 32
    %v265 = vpop.permute.xlu0 %264
    %v268 = vrot.slane %v223, 6
    %v269 = vrot.slane %v224, 6
    %v270 = vsel %vm205, %v268, %v269
    %271 = vrot.lane.b32.xlu0 %v270, 64
    %v272 = vpop.permute.xlu0 %271
    %273 = vrot.lane.b32.xlu0 %v269, 64
    %v274 = vpop.permute.xlu0 %273
    %v278 = vrot.slane %v223, 7
    %v279 = vrot.slane %v224, 7
    %v280 = vsel %vm165, %v278, %v279
    %v281 = vrot.slane 0.0, 7
    %v282 = vsel %vm165, %v279, %v281
    %283 = vrot.lane.b32.xlu0 %v280, 96
    %v284 = vpop.permute.xlu0 %283
    %285 = vrot.lane.b32.xlu0 %v282, 96
    %v286 = vpop.permute.xlu0 %285
    %v289 = vsel %vm91, %v223, %v231
    %v290 = vsel %vm91, %v224, %v233
    %vm291 = vcmask 523264
    %v292 = vsel %vm291, %v289, %v240
    %v293 = vsel %vm291, %v290, %v242
    %vm294 = vcmask 785408
    %v295 = vsel %vm294, %v292, %v249
    %v296 = vsel %vm294, %v293, %v251
    %v297 = vsel %vm91, %v256, %v263
    %v298 = vsel %vm91, %v255, %v265
    %v299 = vsel %vm291, %v297, %v272
    %v300 = vsel %vm291, %v298, %v274
    %v301 = vsel %vm294, %v299, %v284
    %v302 = vsel %vm294, %v300, %v286
    %v303 = vsel %vm165, 0.0, %v159
    %v307 = vrot.slane %v303, 1
    %v308 = vrot.slane %v160, 1
    %v309 = vsel %vm176, %v307, %v308
    %v310 = vrot.slane %v161, 1
    %v311 = vsel %vm176, %v308, %v310
    %v315 = vmax.f32 %v303, %v309
    %v316 = vmax.f32 %v160, %v311
    %v317 = vmax.f32 %v161, %v310
    %v319 = vrot.slane %v315, 1
    %v321 = vrot.slane %v315, 2
    %v323 = vrot.slane %v315, 3
    %v326 = vrot.slane %v316, 4
    %v328 = vrot.slane %v316, 5
    %v330 = vrot.slane %v316, 6
    %v332 = vrot.slane %v316, 7
    %v334 = vsel %vm165, %v315, %v319
    %v335 = vsel %vm205, %v334, %v321
    %v336 = vsel %vm207, %v335, %v323
    %v337 = vsel %vm209, %v336, %v326
    %v338 = vsel %vm211, %v337, %v328
    %v339 = vsel %vm213, %v338, %v330
    %v340 = vsel %vm176, %v339, %v332
    %v343 = vrot.slane %v340, 4
    %v344 = vrot.slane %v317, 4
    %v345 = vsel %vm209, %v343, %v344
    %v348 = vsel %vm209, 0.0, %v343
    %v349 = vsel %vm211, %v345, 0.0
    %v352 = vrot.slane %v348, 1
    %v353 = vrot.slane %v349, 1
    %v354 = vsel %vm176, %v352, %v353
    %355 = vrot.lane.b32.xlu0 %v354, 32
    %v356 = vpop.permute.xlu0 %355
    %357 = vrot.lane.b32.xlu0 %v353, 32
    %v358 = vpop.permute.xlu0 %357
    %v361 = vrot.slane %v348, 2
    %v362 = vrot.slane %v349, 2
    %v363 = vsel %vm213, %v361, %v362
    %364 = vrot.lane.b32.xlu0 %v363, 64
    %v365 = vpop.permute.xlu0 %364
    %366 = vrot.lane.b32.xlu0 %v362, 64
    %v367 = vpop.permute.xlu0 %366
    %v370 = vrot.slane %v348, 3
    %v371 = vrot.slane %v349, 3
    %v372 = vsel %vm211, %v370, %v371
    %373 = vrot.lane.b32.xlu0 %v372, 96
    %v374 = vpop.permute.xlu0 %373
    %375 = vrot.lane.b32.xlu0 %v371, 96
    %v376 = vpop.permute.xlu0 %375
    %v379 = vrot.slane %v348, 4
    %v380 = vrot.slane %v349, 4
    %v381 = vsel %vm209, %v379, %v380
    %v384 = vrot.slane %v348, 5
    %v385 = vrot.slane %v349, 5
    %v386 = vsel %vm207, %v384, %v385
    %387 = vrot.lane.b32.xlu0 %v386, 32
    %v388 = vpop.permute.xlu0 %387
    %389 = vrot.lane.b32.xlu0 %v385, 32
    %v390 = vpop.permute.xlu0 %389
    %v393 = vrot.slane %v348, 6
    %v394 = vrot.slane %v349, 6
    %v395 = vsel %vm205, %v393, %v394
    %396 = vrot.lane.b32.xlu0 %v395, 64
    %v397 = vpop.permute.xlu0 %396
    %398 = vrot.lane.b32.xlu0 %v394, 64
    %v399 = vpop.permute.xlu0 %398
    %v402 = vrot.slane %v348, 7
    %v403 = vrot.slane %v349, 7
    %v404 = vsel %vm165, %v402, %v403
    %v405 = vsel %vm165, %v403, %v281
    %406 = vrot.lane.b32.xlu0 %v404, 96
    %v407 = vpop.permute.xlu0 %406
    %408 = vrot.lane.b32.xlu0 %v405, 96
    %v409 = vpop.permute.xlu0 %408
    %v412 = vsel %vm91, %v348, %v356
    %v413 = vsel %vm91, %v349, %v358
    %v414 = vsel %vm291, %v412, %v365
    %v415 = vsel %vm291, %v413, %v367
    %v416 = vsel %vm294, %v414, %v374
    %v417 = vsel %vm294, %v415, %v376
    %v418 = vsel %vm91, %v381, %v388
    %v419 = vsel %vm91, %v380, %v390
    %v420 = vsel %vm291, %v418, %v397
    %v421 = vsel %vm291, %v419, %v399
    %v422 = vsel %vm294, %v420, %v407
    %v423 = vsel %vm294, %v421, %v409
    %v428 = vrot.slane %v416, 6
    %v429 = vrot.slane %v422, 6
    %v430 = vrot.slane %v417, 6
    %v431 = vsel %vm205, %v428, %v430
    %v432 = vrot.slane %v423, 6
    %v433 = vsel %vm205, %v429, %v432
    %v438 = vsel %vm205, %v296, %v428
    %v439 = vsel %vm205, %v302, %v429
    %v440 = vpack.c.bf16 %v438, %v295
    %v441 = vpack.c.bf16 %v439, %v301
    %v442 = vpack.c.bf16 %v431, %v431
    %v443 = vpack.c.bf16 %v433, %v433
    %v444 = vld [vmem:[#allocation2] sm:$0xf]
    %v445 = vld [vmem:[#allocation2 + $0x4] sm:$0xf]
    %v446 = vld [vmem:[#allocation2 + $0x8] sm:$0xf]
    %v447 = vld [vmem:[#allocation2 + $0xc] sm:$0xf]
    %v448 = vld [vmem:[#allocation2 + $0x10] sm:$0xf]
    %v449 = vld [vmem:[#allocation2 + $0x14] sm:$0xf]
    %v450 = vld [vmem:[#allocation2 + $0x18] sm:$0xf]
    %v451 = vld [vmem:[#allocation2 + $0x1c] sm:$0xf]
    %v452 = vld [vmem:[#allocation2 + $0x20] sm:$0xf]
    %v453 = vld [vmem:[#allocation2 + $0x24] sm:$0xf]
    %v454 = vld [vmem:[#allocation2 + $0x28] sm:$0xf]
    %v455 = vld [vmem:[#allocation2 + $0x2c] sm:$0xf]
    %v456 = vld [vmem:[#allocation2 + $0x30] sm:$0xf]
    %v457 = vld [vmem:[#allocation2 + $0x34] sm:$0xf]
    %v458 = vld [vmem:[#allocation2 + $0x38] sm:$0xf]
    %v459 = vld [vmem:[#allocation2 + $0x3c] sm:$0xf]
    %v460 = vld [vmem:[#allocation2 + $0x40] sm:$0xf]
    %v461 = vld [vmem:[#allocation2 + $0x44] sm:$0xf]
    %v462 = vld [vmem:[#allocation2 + $0x48] sm:$0xf]
    %v463 = vld [vmem:[#allocation2 + $0x4c] sm:$0xf]
    %v464 = vld [vmem:[#allocation2 + $0x50] sm:$0xf]
    %v465 = vld [vmem:[#allocation2 + $0x54] sm:$0xf]
    %v466 = vld [vmem:[#allocation2 + $0x58] sm:$0xf]
    %v467 = vld [vmem:[#allocation2 + $0x5c] sm:$0xf]
    %v468 = vld [vmem:[#allocation2 + $0x60] sm:$0xf]
    %v469 = vld [vmem:[#allocation2 + $0x64] sm:$0xf]
    %v470 = vld [vmem:[#allocation2 + $0x68] sm:$0xf]
    %v471 = vld [vmem:[#allocation2 + $0x6c] sm:$0xf]
    %v472 = vld [vmem:[#allocation2 + $0x70] sm:$0xf]
    %v473 = vld [vmem:[#allocation2 + $0x74] sm:$0xf]
    %v474 = vld [vmem:[#allocation2 + $0x78] sm:$0xf]
    %v475 = vld [vmem:[#allocation2 + $0x7c] sm:$0xf]
    %v476 = vld [vmem:[%s4] sm:$0x1]
    %v478 = vlaneseq
    %v479 = vshrl.u32 %v478, 7
    %v480 = vsub.s32 0, %v479
    %v481 = vrot.slane %v476, %v480
    %v515 = vunpack.c.l.b16 %v444
    %v516 = vunpack.c.l.b16 %v445
    %v517 = vunpack.c.l.b16 %v446
    %v518 = vunpack.c.l.b16 %v447
    %v519 = vunpack.c.l.b16 %v448
    %v520 = vunpack.c.l.b16 %v449
    %v521 = vunpack.c.l.b16 %v450
    %v522 = vunpack.c.l.b16 %v451
    %v523 = vunpack.c.l.b16 %v452
    %v524 = vunpack.c.l.b16 %v453
    %v525 = vunpack.c.l.b16 %v454
    %v526 = vunpack.c.l.b16 %v455
    %v527 = vunpack.c.l.b16 %v456
    %v528 = vunpack.c.l.b16 %v457
    %v529 = vunpack.c.l.b16 %v458
    %v530 = vunpack.c.l.b16 %v459
    %v531 = vunpack.c.l.b16 %v460
    %v532 = vunpack.c.l.b16 %v461
    %v533 = vunpack.c.l.b16 %v462
    %v534 = vunpack.c.l.b16 %v463
    %v535 = vunpack.c.l.b16 %v464
    %v536 = vunpack.c.l.b16 %v465
    %v537 = vunpack.c.l.b16 %v466
    %v538 = vunpack.c.l.b16 %v467
    %v539 = vunpack.c.l.b16 %v468
    %v540 = vunpack.c.l.b16 %v469
    %v541 = vunpack.c.l.b16 %v470
    %v542 = vunpack.c.l.b16 %v471
    %v543 = vunpack.c.l.b16 %v472
    %v544 = vunpack.c.l.b16 %v473
    %v545 = vunpack.c.l.b16 %v474
    %v546 = vunpack.c.l.b16 %v475
    %v547 = vpack.c.b16 %v516, %v515
    %v548 = vpack.c.b16 %v518, %v517
    %v549 = vpack.c.b16 %v520, %v519
    %v550 = vpack.c.b16 %v522, %v521
    %v551 = vpack.c.b16 %v524, %v523
    %v552 = vpack.c.b16 %v526, %v525
    %v553 = vpack.c.b16 %v528, %v527
    %v554 = vpack.c.b16 %v530, %v529
    %v555 = vpack.c.b16 %v532, %v531
    %v556 = vpack.c.b16 %v534, %v533
    %v557 = vpack.c.b16 %v536, %v535
    %v558 = vpack.c.b16 %v538, %v537
    %v559 = vpack.c.b16 %v540, %v539
    %v560 = vpack.c.b16 %v542, %v541
    %v561 = vpack.c.b16 %v544, %v543
    %v562 = vpack.c.b16 %v546, %v545
    %579 = vmatprep.subr.bf16.mxu0 0
    %580 = vmatpush1.bf16.msra.mxu0 %v547
    %581 = vmatprep.subr.bf16.mxu0 0
    %582 = vmatpush1.bf16.msra.mxu0 %v548
    %583 = vmatprep.subr.bf16.mxu0 0
    %584 = vmatpush1.bf16.msra.mxu0 %v549
    %585 = vmatprep.subr.bf16.mxu0 0
    %586 = vmatpush1.bf16.msra.mxu0 %v550
    %587 = vmatprep.subr.bf16.mxu0 0
    %588 = vmatpush1.bf16.msra.mxu0 %v551
    %589 = vmatprep.subr.bf16.mxu0 0
    %590 = vmatpush1.bf16.msra.mxu0 %v552
    %591 = vmatprep.subr.bf16.mxu0 0
    %592 = vmatpush1.bf16.msra.mxu0 %v553
    %593 = vmatprep.subr.bf16.mxu0 0
    %594 = vmatpush1.bf16.msra.mxu0 %v554
    %595 = vmatprep.subr.bf16.mxu0 0
    %596 = vmatpush1.bf16.msra.mxu0 %v555
    %597 = vmatprep.subr.bf16.mxu0 0
    %598 = vmatpush1.bf16.msra.mxu0 %v556
    %599 = vmatprep.subr.bf16.mxu0 0
    %600 = vmatpush1.bf16.msra.mxu0 %v557
    %601 = vmatprep.subr.bf16.mxu0 0
    %602 = vmatpush1.bf16.msra.mxu0 %v558
    %603 = vmatprep.subr.bf16.mxu0 0
    %604 = vmatpush1.bf16.msra.mxu0 %v559
    %605 = vmatprep.subr.bf16.mxu0 0
    %606 = vmatpush1.bf16.msra.mxu0 %v560
    %607 = vmatprep.subr.bf16.mxu0 0
    %608 = vmatpush1.bf16.msra.mxu0 %v561
    %609 = vmatprep.subr.bf16.mxu0 0
    %610 = vmatpush1.bf16.msra.mxu0 %v562
    %611 = vmatprep.mubr.bf16.mxu0 %v441
    %612 = vmatmul.mubr.bf16.gmra.mrb[0].mxu0 %v440
    %v613 = vpop.f32.mrb[0].mxu0
    %v614 = vadd.f32 %v481, %v613
    %v615 = vpop.f32.mrb[0].mxu0
    %v616 = vpop.f32.mrb[0].mxu0
    %v617 = vadd.f32 %v481, %v616
    %v618 = vpop.f32.mrb[0].mxu0
    %619 = vmatprep.mubr.bf16.mxu0 %v443
    %620 = vmatmul.mubr.bf16.gmra.mrb[0].mxu0 %v442
    %v621 = vpop.f32.mrb[0].mxu0
    %v622 = vadd.f32 %v481, %v621
    %v623 = vpop.f32.mrb[0].mxu0
    %v624 = vpop.f32.mrb[0].mxu0
    %v625 = vpop.f32.mrb[0].mxu0
    %626 = vdwg.mxu0
    %v627 = vmax.f32 %v614, 0.0
    %v628 = vmax.f32 %v617, 0.0
    %v629 = vmax.f32 %v622, 0.0
    %v632 = vrot.slane %v627, 7
    %v633 = vrot.slane %v628, 7
    %v634 = vsel %vm165, %v632, %v633
    %v637 = vsel %vm165, 0.0, %v632
    %v638 = vsel %vm207, %v634, 0.0
    %v641 = vrot.slane %v637, 1
    %v642 = vrot.slane %v638, 1
    %v643 = vsel %vm176, %v641, %v642
    %v646 = vmax.f32 %v637, %v643
    %v647 = vmax.f32 %v638, %v642
    %v649 = vrot.slane %v646, 1
    %v651 = vrot.slane %v646, 2
    %v653 = vrot.slane %v646, 3
    %v656 = vrot.slane %v647, 4
    %v658 = vrot.slane %v647, 5
    %v660 = vsel %vm165, %v646, %v649
    %v661 = vsel %vm205, %v660, %v651
    %v662 = vsel %vm207, %v661, %v653
    %v663 = vsel %vm209, %v662, %v656
    %v664 = vsel %vm211, %v663, %v658
    %v666 = vrot.slane %v664, 4
    %v668 = vsel %vm209, 0.0, %v666
    %v669 = vsel %vm205, %v666, 0.0
    %v671 = vrot.slane %v668, 1
    %672 = vrot.lane.b32.xlu0 %v671, 64
    %v673 = vpop.permute.xlu0 %672
    %v676 = vrot.slane %v668, 2
    %v677 = vrot.slane %v669, 2
    %v678 = vsel %vm213, %v676, %v677
    %v680 = vrot.slane %v668, 3
    %v681 = vrot.slane %v669, 3
    %v682 = vsel %vm211, %v680, %v681
    %683 = vrot.lane.b32.xlu0 %v682, 64
    %v684 = vpop.permute.xlu0 %683
    %v686 = vrot.slane %v668, 4
    %v687 = vrot.slane %v669, 4
    %v688 = vsel %vm209, %v686, %v687
    %v690 = vrot.slane %v668, 5
    %v691 = vrot.slane %v669, 5
    %v692 = vsel %vm207, %v690, %v691
    %693 = vrot.lane.b32.xlu0 %v692, 64
    %v694 = vpop.permute.xlu0 %693
    %v696 = vrot.slane %v668, 6
    %v697 = vrot.slane %v669, 6
    %v698 = vsel %vm205, %v696, %v697
    %v700 = vrot.slane %v668, 7
    %v701 = vrot.slane %v669, 7
    %v702 = vsel %vm165, %v700, %v701
    %703 = vrot.lane.b32.xlu0 %v702, 64
    %v704 = vpop.permute.xlu0 %703
    %v706 = vsel %vm291, %v668, %v673
    %v707 = vsel %vm291, %v678, %v684
    %v708 = vsel %vm291, %v688, %v694
    %v709 = vsel %vm291, %v698, %v704
    %v711 = vrot.slane %v628, 1
    %v712 = vrot.slane %v629, 1
    %v713 = vsel %vm176, %v711, %v712
    %v716 = vsel %vm165, 0.0, %v713
    %v717 = vsel %vm207, %v712, 0.0
    %v720 = vrot.slane %v716, 1
    %v721 = vrot.slane %v717, 1
    %v722 = vsel %vm176, %v720, %v721
    %v725 = vmax.f32 %v716, %v722
    %v726 = vmax.f32 %v717, %v721
    %v728 = vrot.slane %v725, 1
    %v730 = vrot.slane %v725, 2
    %v732 = vrot.slane %v725, 3
    %v735 = vrot.slane %v726, 4
    %v737 = vrot.slane %v726, 5
    %v739 = vsel %vm165, %v725, %v728
    %v740 = vsel %vm205, %v739, %v730
    %v741 = vsel %vm207, %v740, %v732
    %v742 = vsel %vm209, %v741, %v735
    %v743 = vsel %vm211, %v742, %v737
    %v745 = vrot.slane %v743, 4
    %v747 = vsel %vm209, 0.0, %v745
    %v748 = vsel %vm205, %v745, 0.0
    %v750 = vrot.slane %v747, 1
    %751 = vrot.lane.b32.xlu0 %v750, 64
    %v752 = vpop.permute.xlu0 %751
    %v755 = vrot.slane %v747, 2
    %v756 = vrot.slane %v748, 2
    %v757 = vsel %vm213, %v755, %v756
    %v759 = vrot.slane %v747, 3
    %v760 = vrot.slane %v748, 3
    %v761 = vsel %vm211, %v759, %v760
    %762 = vrot.lane.b32.xlu0 %v761, 64
    %v763 = vpop.permute.xlu0 %762
    %v765 = vrot.slane %v747, 4
    %v766 = vrot.slane %v748, 4
    %v767 = vsel %vm209, %v765, %v766
    %v769 = vrot.slane %v747, 5
    %v770 = vrot.slane %v748, 5
    %v771 = vsel %vm207, %v769, %v770
    %772 = vrot.lane.b32.xlu0 %v771, 64
    %v773 = vpop.permute.xlu0 %772
    %v775 = vrot.slane %v747, 6
    %v776 = vrot.slane %v748, 6
    %v777 = vsel %vm205, %v775, %v776
    %v779 = vrot.slane %v747, 7
    %v780 = vrot.slane %v748, 7
    %v781 = vsel %vm165, %v779, %v780
    %782 = vrot.lane.b32.xlu0 %v781, 64
    %v783 = vpop.permute.xlu0 %782
    %v785 = vsel %vm291, %v747, %v752
    %v786 = vsel %vm291, %v757, %v763
    %v787 = vsel %vm291, %v767, %v773
    %v788 = vsel %vm291, %v777, %v783
    %v793 = vrot.slane %v785, 1
    %v794 = vrot.slane %v786, 1
    %v795 = vrot.slane %v787, 1
    %v796 = vrot.slane %v788, 1
    %v801 = vsel %vm176, %v706, %v793
    %v802 = vsel %vm176, %v707, %v794
    %v803 = vsel %vm176, %v708, %v795
    %v804 = vsel %vm176, %v709, %v796
    %v805 = vpack.c.bf16 %v793, %v801
    %v806 = vpack.c.bf16 %v794, %v802
    %v807 = vpack.c.bf16 %v795, %v803
    %v808 = vpack.c.bf16 %v796, %v804
    %v809 = vld [vmem:[%s5] sm:$0xf]
    %v810 = vld [vmem:[%s5 + $0x4] sm:$0xf]
    %v811 = vld [vmem:[%s5 + $0x8] sm:$0xf]
    %v812 = vld [vmem:[%s5 + $0xc] sm:$0xf]
    %v813 = vld [vmem:[%s5 + $0x10] sm:$0xf]
    %v814 = vld [vmem:[%s5 + $0x14] sm:$0xf]
    %v815 = vld [vmem:[%s5 + $0x18] sm:$0xf]
    %v816 = vld [vmem:[%s5 + $0x1c] sm:$0xf]
    %v817 = vld [vmem:[%s5 + $0x20] sm:$0xf]
    %v818 = vld [vmem:[%s5 + $0x24] sm:$0xf]
    %v819 = vld [vmem:[%s5 + $0x28] sm:$0xf]
    %v820 = vld [vmem:[%s5 + $0x2c] sm:$0xf]
    %v821 = vld [vmem:[%s5 + $0x30] sm:$0xf]
    %v822 = vld [vmem:[%s5 + $0x34] sm:$0xf]
    %v823 = vld [vmem:[%s5 + $0x38] sm:$0xf]
    %v824 = vld [vmem:[%s5 + $0x3c] sm:$0xf]
    %v825 = vld [vmem:[%s5 + $0x40] sm:$0xf]
    %v826 = vld [vmem:[%s5 + $0x44] sm:$0xf]
    %v827 = vld [vmem:[%s5 + $0x48] sm:$0xf]
    %v828 = vld [vmem:[%s5 + $0x4c] sm:$0xf]
    %v829 = vld [vmem:[%s5 + $0x50] sm:$0xf]
    %v830 = vld [vmem:[%s5 + $0x54] sm:$0xf]
    %v831 = vld [vmem:[%s5 + $0x58] sm:$0xf]
    %v832 = vld [vmem:[%s5 + $0x5c] sm:$0xf]
    %v833 = vld [vmem:[%s5 + $0x60] sm:$0xf]
    %v834 = vld [vmem:[%s5 + $0x64] sm:$0xf]
    %v835 = vld [vmem:[%s5 + $0x68] sm:$0xf]
    %v836 = vld [vmem:[%s5 + $0x6c] sm:$0xf]
    %v837 = vld [vmem:[%s5 + $0x70] sm:$0xf]
    %v838 = vld [vmem:[%s5 + $0x74] sm:$0xf]
    %v839 = vld [vmem:[%s5 + $0x78] sm:$0xf]
    %v840 = vld [vmem:[%s5 + $0x7c] sm:$0xf]
    %v841 = vld [vmem:[%s5 + $0x80] sm:$0xf]
    %v842 = vld [vmem:[%s5 + $0x84] sm:$0xf]
    %v843 = vld [vmem:[%s5 + $0x88] sm:$0xf]
    %v844 = vld [vmem:[%s5 + $0x8c] sm:$0xf]
    %v845 = vld [vmem:[%s5 + $0x90] sm:$0xf]
    %v846 = vld [vmem:[%s5 + $0x94] sm:$0xf]
    %v847 = vld [vmem:[%s5 + $0x98] sm:$0xf]
    %v848 = vld [vmem:[%s5 + $0x9c] sm:$0xf]
    %v849 = vld [vmem:[%s5 + $0xa0] sm:$0xf]
    %v850 = vld [vmem:[%s5 + $0xa4] sm:$0xf]
    %v851 = vld [vmem:[%s5 + $0xa8] sm:$0xf]
    %v852 = vld [vmem:[%s5 + $0xac] sm:$0xf]
    %v853 = vld [vmem:[%s5 + $0xb0] sm:$0xf]
    %v854 = vld [vmem:[%s5 + $0xb4] sm:$0xf]
    %v855 = vld [vmem:[%s5 + $0xb8] sm:$0xf]
    %v856 = vld [vmem:[%s5 + $0xbc] sm:$0xf]
    %v857 = vld [vmem:[%s5 + $0xc0] sm:$0xf]
    %v858 = vld [vmem:[%s5 + $0xc4] sm:$0xf]
    %v859 = vld [vmem:[%s5 + $0xc8] sm:$0xf]
    %v860 = vld [vmem:[%s5 + $0xcc] sm:$0xf]
    %v861 = vld [vmem:[%s5 + $0xd0] sm:$0xf]
    %v862 = vld [vmem:[%s5 + $0xd4] sm:$0xf]
    %v863 = vld [vmem:[%s5 + $0xd8] sm:$0xf]
    %v864 = vld [vmem:[%s5 + $0xdc] sm:$0xf]
    %v865 = vld [vmem:[%s5 + $0xe0] sm:$0xf]
    %v866 = vld [vmem:[%s5 + $0xe4] sm:$0xf]
    %v867 = vld [vmem:[%s5 + $0xe8] sm:$0xf]
    %v868 = vld [vmem:[%s5 + $0xec] sm:$0xf]
    %v869 = vld [vmem:[%s5 + $0xf0] sm:$0xf]
    %v870 = vld [vmem:[%s5 + $0xf4] sm:$0xf]
    %v871 = vld [vmem:[%s5 + $0xf8] sm:$0xf]
    %v872 = vld [vmem:[%s5 + $0xfc] sm:$0xf]
    %v873 = vld [vmem:[%s6] sm:$0x1]
    %v875 = vlaneseq
    %v876 = vshrl.u32 %v875, 7
    %v877 = vsub.s32 0, %v876
    %v878 = vrot.slane %v873, %v877
    %v944 = vunpack.c.l.b16 %v809
    %v945 = vunpack.c.l.b16 %v810
    %v946 = vunpack.c.l.b16 %v811
    %v947 = vunpack.c.l.b16 %v812
    %v948 = vunpack.c.l.b16 %v813
    %v949 = vunpack.c.l.b16 %v814
    %v950 = vunpack.c.l.b16 %v815
    %v951 = vunpack.c.l.b16 %v816
    %v952 = vunpack.c.l.b16 %v817
    %v953 = vunpack.c.l.b16 %v818
    %v954 = vunpack.c.l.b16 %v819
    %v955 = vunpack.c.l.b16 %v820
    %v956 = vunpack.c.l.b16 %v821
    %v957 = vunpack.c.l.b16 %v822
    %v958 = vunpack.c.l.b16 %v823
    %v959 = vunpack.c.l.b16 %v824
    %v960 = vunpack.c.l.b16 %v825
    %v961 = vunpack.c.l.b16 %v826
    %v962 = vunpack.c.l.b16 %v827
    %v963 = vunpack.c.l.b16 %v828
    %v964 = vunpack.c.l.b16 %v829
    %v965 = vunpack.c.l.b16 %v830
    %v966 = vunpack.c.l.b16 %v831
    %v967 = vunpack.c.l.b16 %v832
    %v968 = vunpack.c.l.b16 %v833
    %v969 = vunpack.c.l.b16 %v834
    %v970 = vunpack.c.l.b16 %v835
    %v971 = vunpack.c.l.b16 %v836
    %v972 = vunpack.c.l.b16 %v837
    %v973 = vunpack.c.l.b16 %v838
    %v974 = vunpack.c.l.b16 %v839
    %v975 = vunpack.c.l.b16 %v840
    %v976 = vunpack.c.l.b16 %v841
    %v977 = vunpack.c.l.b16 %v842
    %v978 = vunpack.c.l.b16 %v843
    %v979 = vunpack.c.l.b16 %v844
    %v980 = vunpack.c.l.b16 %v845
    %v981 = vunpack.c.l.b16 %v846
    %v982 = vunpack.c.l.b16 %v847
    %v983 = vunpack.c.l.b16 %v848
    %v984 = vunpack.c.l.b16 %v849
    %v985 = vunpack.c.l.b16 %v850
    %v986 = vunpack.c.l.b16 %v851
    %v987 = vunpack.c.l.b16 %v852
    %v988 = vunpack.c.l.b16 %v853
    %v989 = vunpack.c.l.b16 %v854
    %v990 = vunpack.c.l.b16 %v855
    %v991 = vunpack.c.l.b16 %v856
    %v992 = vunpack.c.l.b16 %v857
    %v993 = vunpack.c.l.b16 %v858
    %v994 = vunpack.c.l.b16 %v859
    %v995 = vunpack.c.l.b16 %v860
    %v996 = vunpack.c.l.b16 %v861
    %v997 = vunpack.c.l.b16 %v862
    %v998 = vunpack.c.l.b16 %v863
    %v999 = vunpack.c.l.b16 %v864
    %v1000 = vunpack.c.l.b16 %v865
    %v1001 = vunpack.c.l.b16 %v866
    %v1002 = vunpack.c.l.b16 %v867
    %v1003 = vunpack.c.l.b16 %v868
    %v1004 = vunpack.c.l.b16 %v869
    %v1005 = vunpack.c.l.b16 %v870
    %v1006 = vunpack.c.l.b16 %v871
    %v1007 = vunpack.c.l.b16 %v872
    %v1008 = vpack.c.b16 %v945, %v944
    %v1009 = vpack.c.b16 %v947, %v946
    %v1010 = vpack.c.b16 %v949, %v948
    %v1011 = vpack.c.b16 %v951, %v950
    %v1012 = vpack.c.b16 %v953, %v952
    %v1013 = vpack.c.b16 %v955, %v954
    %v1014 = vpack.c.b16 %v957, %v956
    %v1015 = vpack.c.b16 %v959, %v958
    %v1016 = vpack.c.b16 %v961, %v960
    %v1017 = vpack.c.b16 %v963, %v962
    %v1018 = vpack.c.b16 %v965, %v964
    %v1019 = vpack.c.b16 %v967, %v966
    %v1020 = vpack.c.b16 %v969, %v968
    %v1021 = vpack.c.b16 %v971, %v970
    %v1022 = vpack.c.b16 %v973, %v972
    %v1023 = vpack.c.b16 %v975, %v974
    %v1024 = vpack.c.b16 %v977, %v976
    %v1025 = vpack.c.b16 %v979, %v978
    %v1026 = vpack.c.b16 %v981, %v980
    %v1027 = vpack.c.b16 %v983, %v982
    %v1028 = vpack.c.b16 %v985, %v984
    %v1029 = vpack.c.b16 %v987, %v986
    %v1030 = vpack.c.b16 %v989, %v988
    %v1031 = vpack.c.b16 %v991, %v990
    %v1032 = vpack.c.b16 %v993, %v992
    %v1033 = vpack.c.b16 %v995, %v994
    %v1034 = vpack.c.b16 %v997, %v996
    %v1035 = vpack.c.b16 %v999, %v998
    %v1036 = vpack.c.b16 %v1001, %v1000
    %v1037 = vpack.c.b16 %v1003, %v1002
    %v1038 = vpack.c.b16 %v1005, %v1004
    %v1039 = vpack.c.b16 %v1007, %v1006
    %1072 = vmatprep.subr.bf16.mxu0 0
    %1073 = vmatpush1.bf16.msra.mxu0 %v1008
    %1074 = vmatprep.subr.bf16.mxu0 0
    %1075 = vmatpush1.bf16.msra.mxu0 %v1009
    %1076 = vmatprep.subr.bf16.mxu0 0
    %1077 = vmatpush1.bf16.msra.mxu0 %v1010
    %1078 = vmatprep.subr.bf16.mxu0 0
    %1079 = vmatpush1.bf16.msra.mxu0 %v1011
    %1080 = vmatprep.subr.bf16.mxu0 0
    %1081 = vmatpush1.bf16.msra.mxu0 %v1012
    %1082 = vmatprep.subr.bf16.mxu0 0
    %1083 = vmatpush1.bf16.msra.mxu0 %v1013
    %1084 = vmatprep.subr.bf16.mxu0 0
    %1085 = vmatpush1.bf16.msra.mxu0 %v1014
    %1086 = vmatprep.subr.bf16.mxu0 0
    %1087 = vmatpush1.bf16.msra.mxu0 %v1015
    %1088 = vmatprep.subr.bf16.mxu0 0
    %1089 = vmatpush1.bf16.msra.mxu0 %v1016
    %1090 = vmatprep.subr.bf16.mxu0 0
    %1091 = vmatpush1.bf16.msra.mxu0 %v1017
    %1092 = vmatprep.subr.bf16.mxu0 0
    %1093 = vmatpush1.bf16.msra.mxu0 %v1018
    %1094 = vmatprep.subr.bf16.mxu0 0
    %1095 = vmatpush1.bf16.msra.mxu0 %v1019
    %1096 = vmatprep.subr.bf16.mxu0 0
    %1097 = vmatpush1.bf16.msra.mxu0 %v1020
    %1098 = vmatprep.subr.bf16.mxu0 0
    %1099 = vmatpush1.bf16.msra.mxu0 %v1021
    %1100 = vmatprep.subr.bf16.mxu0 0
    %1101 = vmatpush1.bf16.msra.mxu0 %v1022
    %1102 = vmatprep.subr.bf16.mxu0 0
    %1103 = vmatpush1.bf16.msra.mxu0 %v1023
    %1104 = vmatprep.mubr.bf16.mxu0 %v806
    %1105 = vmatmul.mubr.bf16.gmra.mrb[0].mxu0 %v805
    %v1106 = vpop.f32.mrb[0].mxu0
    %v1107 = vadd.f32 %v878, %v1106
    %v1108 = vpop.f32.mrb[0].mxu0
    %v1109 = vpop.f32.mrb[0].mxu0
    %v1110 = vadd.f32 %v878, %v1109
    %v1111 = vpop.f32.mrb[0].mxu0
    %1112 = vdwg.mxu0
    %1113 = vmatprep.subr.bf16.mxu0 0
    %1114 = vmatpush1.bf16.msra.mxu0 %v1024
    %1115 = vmatprep.subr.bf16.mxu0 0
    %1116 = vmatpush1.bf16.msra.mxu0 %v1025
    %1117 = vmatprep.subr.bf16.mxu0 0
    %1118 = vmatpush1.bf16.msra.mxu0 %v1026
    %1119 = vmatprep.subr.bf16.mxu0 0
    %1120 = vmatpush1.bf16.msra.mxu0 %v1027
    %1121 = vmatprep.subr.bf16.mxu0 0
    %1122 = vmatpush1.bf16.msra.mxu0 %v1028
    %1123 = vmatprep.subr.bf16.mxu0 0
    %1124 = vmatpush1.bf16.msra.mxu0 %v1029
    %1125 = vmatprep.subr.bf16.mxu0 0
    %1126 = vmatpush1.bf16.msra.mxu0 %v1030
    %1127 = vmatprep.subr.bf16.mxu0 0
    %1128 = vmatpush1.bf16.msra.mxu0 %v1031
    %1129 = vmatprep.subr.bf16.mxu0 0
    %1130 = vmatpush1.bf16.msra.mxu0 %v1032
    %1131 = vmatprep.subr.bf16.mxu0 0
    %1132 = vmatpush1.bf16.msra.mxu0 %v1033
    %1133 = vmatprep.subr.bf16.mxu0 0
    %1134 = vmatpush1.bf16.msra.mxu0 %v1034
    %1135 = vmatprep.subr.bf16.mxu0 0
    %1136 = vmatpush1.bf16.msra.mxu0 %v1035
    %1137 = vmatprep.subr.bf16.mxu0 0
    %1138 = vmatpush1.bf16.msra.mxu0 %v1036
    %1139 = vmatprep.subr.bf16.mxu0 0
    %1140 = vmatpush1.bf16.msra.mxu0 %v1037
    %1141 = vmatprep.subr.bf16.mxu0 0
    %1142 = vmatpush1.bf16.msra.mxu0 %v1038
    %1143 = vmatprep.subr.bf16.mxu0 0
    %1144 = vmatpush1.bf16.msra.mxu0 %v1039
    %1145 = vmatprep.mubr.bf16.mxu0 %v808
    %1146 = vmatmul.mubr.bf16.gmra.mrb[0].mxu0 %v807
    %v1147 = vpop.f32.mrb[0].mxu0
    %v1148 = vadd.f32 %v1107, %v1147
    %v1149 = vpop.f32.mrb[0].mxu0
    %v1150 = vpop.f32.mrb[0].mxu0
    %v1151 = vadd.f32 %v1110, %v1150
    %v1152 = vpop.f32.mrb[0].mxu0
    %1153 = vdwg.mxu0
    %v1154 = vmax.f32 %v1148, 0.0
    %v1155 = vmax.f32 %v1151, 0.0
    %v1157 = vrot.slane %v1154, 7
    %v1159 = vsel %vm165, 0.0, %v1157
    %v1161 = vrot.slane %v1159, 1
    %v1163 = vmax.f32 %v1159, %v1161
    %v1165 = vrot.slane %v1163, 1
    %v1167 = vrot.slane %v1163, 2
    %v1169 = vrot.slane %v1163, 3
    %v1171 = vsel %vm165, %v1163, %v1165
    %v1172 = vsel %vm205, %v1171, %v1167
    %v1173 = vsel %vm207, %v1172, %v1169
    %1174 = vxpose.xlu0.b32.start [1/16] %v1173, 128
    %1175 = vxpose.xlu0.b32.cont [2/16] 0.0, 128
    %1176 = vxpose.xlu0.b32.cont [3/16] 0.0, 128
    %1177 = vxpose.xlu0.b32.cont [4/16] 0.0, 128
    %1178 = vxpose.xlu0.b32.cont [5/16] 0.0, 128
    %1179 = vxpose.xlu0.b32.cont [6/16] 0.0, 128
    %1180 = vxpose.xlu0.b32.cont [7/16] 0.0, 128
    %1181 = vxpose.xlu0.b32.cont [8/16] 0.0, 128
    %1182 = vxpose.xlu0.b32.cont [9/16] 0.0, 128
    %1183 = vxpose.xlu0.b32.cont [10/16] 0.0, 128
    %1184 = vxpose.xlu0.b32.cont [11/16] 0.0, 128
    %1185 = vxpose.xlu0.b32.cont [12/16] 0.0, 128
    %1186 = vxpose.xlu0.b32.cont [13/16] 0.0, 128
    %1187 = vxpose.xlu0.b32.cont [14/16] 0.0, 128
    %1188 = vxpose.xlu0.b32.cont [15/16] 0.0, 128
    %1189 = vxpose.xlu0.b32.end [16/16] 0.0, 128
    %v1190 = vpop.trf.xlu0
    %v1191 = vpop.trf.xlu0
    %v1192 = vpop.trf.xlu0
    %v1193 = vpop.trf.xlu0
    %v1194 = vpop.trf.xlu0
    %v1195 = vpop.trf.xlu0
    %v1196 = vpop.trf.xlu0
    %v1197 = vpop.trf.xlu0
    %v1198 = vpop.trf.xlu0
    %v1199 = vpop.trf.xlu0
    %v1200 = vpop.trf.xlu0
    %v1201 = vpop.trf.xlu0
    %v1202 = vpop.trf.xlu0
    %v1203 = vpop.trf.xlu0
    %v1204 = vpop.trf.xlu0
    %v1205 = vpop.trf.xlu0
    %vm1206 = vcmask 31744
    %1207 = vst.msk [vmem:[%s10] sm:$0xff] %vm1206, %v1190
    %1208 = vst.msk [vmem:[%s10 + $0x8] sm:$0xff] %vm1206, %v1191
    %v1210 = vrot.slane %v1173, 1
    %1211 = vrot.lane.b32.xlu0 %v1210, 16
    %v1212 = vpop.permute.xlu0 %1211
    %v1214 = vrot.slane %v1173, 2
    %1215 = vrot.lane.b32.xlu0 %v1214, 32
    %v1216 = vpop.permute.xlu0 %1215
    %v1218 = vrot.slane %v1173, 3
    %1219 = vrot.lane.b32.xlu0 %v1218, 48
    %v1220 = vpop.permute.xlu0 %1219
    %vm1222 = vcmask 130048
    %v1223 = vsel %vm1222, %v1173, %v1212
    %v1224 = vsel %vm91, %v1223, %v1216
    %vm1225 = vcmask 392192
    %v1226 = vsel %vm1225, %v1224, %v1220
    %v1228 = vrot.slane %v1154, 6
    %v1229 = vrot.slane %v1155, 6
    %v1230 = vsel %vm205, %v1228, %v1229
    %v1232 = vsel %vm165, 0.0, %v1230
    %v1234 = vrot.slane %v1232, 1
    %v1236 = vmax.f32 %v1232, %v1234
    %v1238 = vrot.slane %v1236, 1
    %v1240 = vrot.slane %v1236, 2
    %v1242 = vrot.slane %v1236, 3
    %v1244 = vsel %vm165, %v1236, %v1238
    %v1245 = vsel %vm205, %v1244, %v1240
    %v1246 = vsel %vm207, %v1245, %v1242
    %1247 = vxpose.xlu0.b32.start [1/16] %v1246, 128
    %1248 = vxpose.xlu0.b32.cont [2/16] 0.0, 128
    %1249 = vxpose.xlu0.b32.cont [3/16] 0.0, 128
    %1250 = vxpose.xlu0.b32.cont [4/16] 0.0, 128
    %1251 = vxpose.xlu0.b32.cont [5/16] 0.0, 128
    %1252 = vxpose.xlu0.b32.cont [6/16] 0.0, 128
    %1253 = vxpose.xlu0.b32.cont [7/16] 0.0, 128
    %1254 = vxpose.xlu0.b32.cont [8/16] 0.0, 128
    %1255 = vxpose.xlu0.b32.cont [9/16] 0.0, 128
    %1256 = vxpose.xlu0.b32.cont [10/16] 0.0, 128
    %1257 = vxpose.xlu0.b32.cont [11/16] 0.0, 128
    %1258 = vxpose.xlu0.b32.cont [12/16] 0.0, 128
    %1259 = vxpose.xlu0.b32.cont [13/16] 0.0, 128
    %1260 = vxpose.xlu0.b32.cont [14/16] 0.0, 128
    %1261 = vxpose.xlu0.b32.cont [15/16] 0.0, 128
    %1262 = vxpose.xlu0.b32.end [16/16] 0.0, 128
    %v1263 = vpop.trf.xlu0
    %v1264 = vpop.trf.xlu0
    %v1265 = vpop.trf.xlu0
    %v1266 = vpop.trf.xlu0
    %v1267 = vpop.trf.xlu0
    %v1268 = vpop.trf.xlu0
    %v1269 = vpop.trf.xlu0
    %v1270 = vpop.trf.xlu0
    %v1271 = vpop.trf.xlu0
    %v1272 = vpop.trf.xlu0
    %v1273 = vpop.trf.xlu0
    %v1274 = vpop.trf.xlu0
    %v1275 = vpop.trf.xlu0
    %v1276 = vpop.trf.xlu0
    %v1277 = vpop.trf.xlu0
    %v1278 = vpop.trf.xlu0
    %s1279 = scalar_lea.vmem %s10, 16
    %1280 = vst.msk [vmem:[%s1279] sm:$0xff] %vm1206, %v1263
    %1281 = vst.msk [vmem:[%s1279 + $0x8] sm:$0xff] %vm1206, %v1264
    %v1283 = vrot.slane %v1246, 1
    %1284 = vrot.lane.b32.xlu0 %v1283, 16
    %v1285 = vpop.permute.xlu0 %1284
    %v1287 = vrot.slane %v1246, 2
    %1288 = vrot.lane.b32.xlu0 %v1287, 32
    %v1289 = vpop.permute.xlu0 %1288
    %v1291 = vrot.slane %v1246, 3
    %1292 = vrot.lane.b32.xlu0 %v1291, 48
    %v1293 = vpop.permute.xlu0 %1292
    %v1295 = vsel %vm1222, %v1246, %v1285
    %v1296 = vsel %vm91, %v1295, %v1289
    %v1297 = vsel %vm1225, %v1296, %v1293
    %v1299 = vrot.slane %v1297, 7
    %v1301 = vsel %vm165, %v1226, %v1299
    %v1302 = vpack.c.bf16 %v1301, %v1301
    %v1303 = vld [vmem:[%s7] sm:$0xf]
    %v1304 = vld [vmem:[%s7 + $0x4] sm:$0xf]
    %v1305 = vld [vmem:[%s7 + $0x8] sm:$0xf]
    %v1306 = vld [vmem:[%s7 + $0xc] sm:$0xf]
    %v1307 = vld [vmem:[%s7 + $0x10] sm:$0xf]
    %v1308 = vld [vmem:[%s7 + $0x14] sm:$0xf]
    %v1309 = vld [vmem:[%s7 + $0x18] sm:$0xf]
    %v1310 = vld [vmem:[%s7 + $0x1c] sm:$0xf]
    %v1311 = vld [vmem:[%s8] sm:$0x1]
    %v1313 = vlaneseq
    %v1314 = vshrl.u32 %v1313, 7
    %v1315 = vsub.s32 0, %v1314
    %v1316 = vrot.slane %v1311, %v1315
    %v1326 = vunpack.c.l.b16 %v1303
    %v1327 = vunpack.c.l.b16 %v1304
    %v1328 = vunpack.c.l.b16 %v1305
    %v1329 = vunpack.c.l.b16 %v1306
    %v1330 = vunpack.c.l.b16 %v1307
    %v1331 = vunpack.c.l.b16 %v1308
    %v1332 = vunpack.c.l.b16 %v1309
    %v1333 = vunpack.c.l.b16 %v1310
    %v1334 = vpack.c.b16 %v1327, %v1326
    %v1335 = vpack.c.b16 %v1329, %v1328
    %v1336 = vpack.c.b16 %v1331, %v1330
    %v1337 = vpack.c.b16 %v1333, %v1332
    %v1343 = vsel %vm291, %v1302, 0
    %1345 = vmatprep.subr.bf16.mxu0 0
    %1346 = vmatpush1.bf16.msra.mxu0 %v1334
    %1347 = vmatprep.subr.bf16.mxu0 0
    %1348 = vmatpush1.bf16.msra.mxu0 %v1335
    %1349 = vmatprep.subr.bf16.mxu0 0
    %1350 = vmatpush1.bf16.msra.mxu0 %v1336
    %1351 = vmatprep.subr.bf16.mxu0 0
    %1352 = vmatpush1.bf16.msra.mxu0 %v1337
    %1353 = vmatprep.subr.bf16.mxu0 0
    %1354 = vmatpush1.bf16.msra.mxu0 0
    %1355 = vmatprep.subr.bf16.mxu0 0
    %1356 = vmatpush1.bf16.msra.mxu0 0
    %1357 = vmatprep.subr.bf16.mxu0 0
    %1358 = vmatpush1.bf16.msra.mxu0 0
    %1359 = vmatprep.subr.bf16.mxu0 0
    %1360 = vmatpush1.bf16.msra.mxu0 0
    %1361 = vmatprep.subr.bf16.mxu0 0
    %1362 = vmatpush1.bf16.msra.mxu0 0
    %1363 = vmatprep.subr.bf16.mxu0 0
    %1364 = vmatpush1.bf16.msra.mxu0 0
    %1365 = vmatprep.subr.bf16.mxu0 0
    %1366 = vmatpush1.bf16.msra.mxu0 0
    %1367 = vmatprep.subr.bf16.mxu0 0
    %1368 = vmatpush1.bf16.msra.mxu0 0
    %1369 = vmatprep.subr.bf16.mxu0 0
    %1370 = vmatpush1.bf16.msra.mxu0 0
    %1371 = vmatprep.subr.bf16.mxu0 0
    %1372 = vmatpush1.bf16.msra.mxu0 0
    %1373 = vmatprep.subr.bf16.mxu0 0
    %1374 = vmatpush1.bf16.msra.mxu0 0
    %1375 = vmatprep.subr.bf16.mxu0 0
    %1376 = vmatpush1.bf16.msra.mxu0 0
    %1377 = vmatprep.mubr.bf16.mxu0 0
    %1378 = vmatmul.mubr.bf16.gmra.mrb[0].mxu0 %v1343
    %v1379 = vpop.f32.mrb[0].mxu0
    %v1380 = vadd.f32 %v1316, %v1379
    %v1381 = vpop.f32.mrb[0].mxu0
    %v1382 = vpop.f32.mrb[0].mxu0
    %v1383 = vpop.f32.mrb[0].mxu0
    %1384 = vdwg.mxu0
    %vm1385 = vcmask 33792
    %1386 = vst.msk [vmem:[#allocation5] sm:$0x3] %vm1385, %v1380
    // Predicated region
    $region42: #{_lambda_.1} parent=1 // pred_check
      _
    $region43: #{_lambda_.1} parent=1 // pred_check_branch
      %1388 = sbr.rel (0) target = $region45
    $region44: #{_lambda_.1} parent=1 // pred_region
      %s1390 = ssub.s32 32, 32
      %1391 = vsyncadd [#allocation4], %s1390
      %s1393 = sshll.u32 [#allocation5], 4
      %s1394 = int_to_ptr.vmem [resolvable:$true] %s1393
      %1396 = dma.vmem_to_hbm [thread:$0]  %s1394, 32, %s9, [#allocation4]
    $region45: #{_lambda_.1} parent=1 // pred_fallthru
      _
    // Predicated region
    $region46: #{_lambda_.1} parent=1 // pred_check
      _
    $region47: #{_lambda_.1} parent=1 // pred_check_branch
      %1398 = sbr.rel (0) target = $region49
    $region48: #{_lambda_.1} parent=1 // pred_region
      _
    $region49: #{_lambda_.1} parent=1 // pred_fallthru
      _
    // Predicated region
    $region50: #{_lambda_.1} parent=1 // pred_check
      _
    $region51: #{_lambda_.1} parent=1 // pred_check_branch
      %1400 = sbr.rel (0) target = $region53
    $region52: #{_lambda_.1} parent=1 // pred_region
      %1401 = dma.done [#allocation4], 32
    $region53: #{_lambda_.1} parent=1 // pred_fallthru
      _
    // Predicated region
    $region54: #{_lambda_.1} parent=1 // pred_check
      _
    $region55: #{_lambda_.1} parent=1 // pred_check_branch
      %1403 = sbr.rel (0) target = $region57
    $region56: #{_lambda_.1} parent=1 // pred_region
      _
    $region57: #{_lambda_.1} parent=1 // pred_fallthru
      _
    %1404 = vsyncpa [#allocation3], 1
    %1405 = vsyncpa [#allocation4], 1

</llo_original>
